<compile_context>
chip_gen: v6e
topology: v6e:2x2x1
jax: 0.10.0
libtpu: 0.0.40
codegen_flags: <defaults>
</compile_context>

<pallas_src>
import functools

import jax
import jax.numpy as jnp
from jax.experimental import pallas as pl
from jax.experimental.pallas import tpu as pltpu


# ---------------------------------------------------------------------------
# Kernels
# ---------------------------------------------------------------------------

def _ffn_kernel_scratch(x_ref, w1_ref, b1_ref, w2_ref, b2_ref, o_ref, acc_ref):
    """(row tile i, hidden tile k): acc += ReLU(x@W1_k + b1_k) @ W2_k ; out = acc + b2."""
    k = pl.program_id(1)

    @pl.when(k == 0)
    def _init():
        acc_ref[...] = jnp.zeros_like(acc_ref)

    h = jnp.dot(x_ref[...], w1_ref[...], preferred_element_type=jnp.float32)
    h = jnp.maximum(h + b1_ref[...], 0.0)
    acc_ref[...] += jnp.dot(h.astype(w2_ref.dtype), w2_ref[...],
                            preferred_element_type=jnp.float32)

    @pl.when(k == pl.num_programs(1) - 1)
    def _finalize():
        o_ref[...] = (acc_ref[...] + b2_ref[...]).astype(o_ref.dtype)


def _ffn_kernel_f32out(x_ref, w1_ref, b1_ref, w2_ref, b2_ref, o_ref):
    """f32-output fast path: accumulate directly into the k-resident output block."""
    k = pl.program_id(1)

    @pl.when(k == 0)
    def _init():
        o_ref[...] = jnp.broadcast_to(b2_ref[...].astype(jnp.float32), o_ref.shape)

    h = jnp.dot(x_ref[...], w1_ref[...], preferred_element_type=jnp.float32)
    h = jnp.maximum(h + b1_ref[...], 0.0)
    o_ref[...] += jnp.dot(h.astype(w2_ref.dtype), w2_ref[...],
                          preferred_element_type=jnp.float32)


# ---------------------------------------------------------------------------
# Tile selection (roofline + VMEM aware)
# ---------------------------------------------------------------------------

def _round_up(v, m):
    return -(-v // m) * m


def _largest_divisor_tile(hidden, cap):
    """Largest multiple of 128 dividing `hidden` and <= cap (else full hidden)."""
    if hidden <= cap:
        return hidden
    t = (cap // 128) * 128
    while t >= 128:
        if hidden % t == 0:
            return t
        t -= 128
    return hidden


def _vmem_capacity_bytes():
    try:
        cap = getattr(pltpu.get_tpu_info(), "vmem_capacity_bytes", None)
        if cap:
            return int(cap)
    except Exception:
        pass
    return 64 * 1024 * 1024  # conservative default: v7x has 64 MiB per TensorCore


def _vmem_footprint(tm, th, n, xsize, wsize, separate_acc):
    """Estimated peak VMEM for one grid step, incl. double buffering and temps."""
    x_io = 2 * tm * n * xsize                 # x tile (double-buffered)
    out = 2 * tm * n * xsize                  # out tile (double-buffered)
    w1 = 2 * n * th * wsize                   # W1 slice (double-buffered)
    b1 = 2 * max(th, 128) * wsize
    w2 = 2 * th * n * wsize                   # W2 slice (double-buffered)
    b2 = 2 * max(n, 128) * wsize
    h = tm * th * 4 + tm * th * wsize         # f32 h + its low-precision cast copy
    acc = tm * n * 4 if separate_acc else 0
    return x_io + out + w1 + b1 + w2 + b2 + h + acc


def _choose_tiles(m, n, hidden, xsize, wsize, separate_acc, budget):
    m_pad = max(8, _round_up(m, 8))

    def fits(tm, th):
        return _vmem_footprint(tm, th, n, xsize, wsize, separate_acc) <= budget

    # 1) Weight-resident fast path: th == hidden -> weight block indices are
    #    constant across the whole grid, so W1/W2 are fetched from HBM once and
    #    reused by every row tile (removes the dominant HBM term entirely).
    for tm in (512, 384, 256, 128):
        tm = min(tm, m_pad)
        if fits(tm, hidden):
            return tm, hidden

    # 2) Streamed weights: weights are re-read once per row tile, so make tm as
    #    large as the VMEM budget allows (flops per weight byte ~ 2*tm/itemsize).
    th = _largest_divisor_tile(hidden, cap=1024)   # keeps v7x (64 MiB VMEM) safe
    for tm in (1024, 768, 512, 384, 256, 128, 64, 32, 16, 8):
        tm = min(tm, m_pad)
        if fits(tm, th):
            return tm, th

    # 3) Last resort: smallest aligned tiles.
    return min(8, m_pad), _largest_divisor_tile(hidden, cap=128)


# ---------------------------------------------------------------------------
# Wrapper
# ---------------------------------------------------------------------------

@functools.partial(jax.jit, static_argnames=("tm", "th"))
def linear_relu_ffn(x, w1, b1, w2, b2, *, tm=None, th=None):
    """Eval-mode forward: Linear(n,4n) -> ReLU -> Linear(4n,n) (dropout = identity).

    x: (..., n), w1: (n, 4n), b1: (4n,), w2: (4n, n), b2: (n,).
    """
    orig_shape = x.shape
    n = orig_shape[-1]
    hidden = w1.shape[1]
    assert w1.shape == (n, hidden) and w2.shape == (hidden, n)
    assert b1.shape == (hidden,) and b2.shape == (n,)

    x2d = x.reshape(-1, n)
    m = x2d.shape[0]

    xsize = x.dtype.itemsize
    wsize = w1.dtype.itemsize
    out_dtype = x.dtype
    separate_acc = out_dtype != jnp.float32   # f32 outputs accumulate in-place

    cap = _vmem_capacity_bytes()
    # Never claim the whole physical VMEM; leave headroom for compiler scratch.
    budget = min(cap - 8 * 1024 * 1024, int(0.875 * cap))

    auto_tm, auto_th = _choose_tiles(m, n, hidden, xsize, wsize, separate_acc, budget)
    if tm is None:
        tm = auto_tm
    if th is None:
        th = auto_th

    # Correctness guards for user-supplied tiles: a th that does not divide
    # `hidden` would double-count the clamped last hidden slice in the
    # accumulator; th must also stay lane-aligned (or be the full dimension).
    assert hidden % th == 0, "hidden tile th must evenly divide 4*n"
    assert th == hidden or th % 128 == 0, "th must be a multiple of 128 (or == 4*n)"
    assert tm % 8 == 0 or tm >= m, "row tile tm must be a multiple of 8"

    grid = (pl.cdiv(m, tm), pl.cdiv(hidden, th))
    num_row_tiles = grid[0]
    weights_resident = th == hidden

    b1_2d = b1.reshape(1, hidden)
    b2_2d = b2.reshape(1, n)

    # Truthful advisory cost: streamed weights are re-read once per row tile.
    weight_bytes = (n * hidden + hidden + hidden * n + n) * wsize
    if not weights_resident:
        weight_bytes *= num_row_tiles
    cost = pl.CostEstimate(
        flops=4 * m * n * hidden,              # two matmuls, 2*M*K*N flops each
        transcendentals=0,
        bytes_accessed=2 * m * n * xsize + weight_bytes,
    )

    footprint = _vmem_footprint(tm, th, n, xsize, wsize, separate_acc)
    vmem_limit = int(min(max(int(1.25 * footprint) + (2 << 20), 16 << 20), budget))

    in_specs = [
        pl.BlockSpec((tm, n), lambda i, k: (i, 0)),        # x rows (k-invariant)
        pl.BlockSpec((n, th), lambda i, k: (0, k)),        # W1 hidden slice
        pl.BlockSpec((1, th), lambda i, k: (0, k)),        # b1 hidden slice
        pl.BlockSpec((th, n), lambda i, k: (k, 0)),        # W2 hidden slice
        pl.BlockSpec((1, n), lambda i, k: (0, 0)),         # b2 (grid-invariant)
    ]
    out_spec = pl.BlockSpec((tm, n), lambda i, k: (i, 0))  # resident over k

    if separate_acc:
        kernel = _ffn_kernel_scratch
        scratch_shapes = [pltpu.VMEM((tm, n), jnp.float32)]
    else:
        kernel = _ffn_kernel_f32out
        scratch_shapes = []

    out = pl.pallas_call(
        kernel,
        out_shape=jax.ShapeDtypeStruct((m, n), out_dtype),
        grid_spec=pltpu.PrefetchScalarGridSpec(
            num_scalar_prefetch=0,
            grid=grid,
            in_specs=in_specs,
            out_specs=out_spec,
            scratch_shapes=scratch_shapes,
        ),
        compiler_params=pltpu.CompilerParams(
            # Row axis independent (megacore-shardable on v7x); hidden axis is
            # the reduction and must stay "arbitrary".
            dimension_semantics=("parallel", "arbitrary"),
            vmem_limit_bytes=vmem_limit,
        ),
        cost_estimate=cost,
    )(x2d, w1, b1_2d, w2, b2_2d)

    return out.reshape(orig_shape)


def init_params(key, n, dtype=jnp.float32):
    """Deterministic init mirroring nn.Linear shapes (stored transposed: (in, out))."""
    k1, k2, k3, k4 = jax.random.split(key, 4)
    hidden = 4 * n
    lim1 = 1.0 / jnp.sqrt(n)
    lim2 = 1.0 / jnp.sqrt(hidden)
    w1 = jax.random.uniform(k1, (n, hidden), dtype, -lim1, lim1)   # Linear(n, 4n).weight.T
    b1 = jax.random.uniform(k2, (hidden,), dtype, -lim1, lim1)
    w2 = jax.random.uniform(k3, (hidden, n), dtype, -lim2, lim2)   # Linear(4n, n).weight.T
    b2 = jax.random.uniform(k4, (n,), dtype, -lim2, lim2)
    return w1, b1, w2, b2


if __name__ == "__main__":
    key = jax.random.PRNGKey(0)
    kx, kp = jax.random.split(key)

    # Small but lane-dense demo: n = 128 (hidden = 512), M = batch*seq = 512 rows.
    batch, seq, n = 2, 256, 128
    x = jax.random.normal(kx, (batch, seq, n), jnp.float32)
    w1, b1, w2, b2 = init_params(kp, n, dtype=jnp.float32)

    ref = jnp.maximum(x @ w1 + b1, 0.0) @ w2 + b2

    # 1) Auto-tiled run (picks the weight-resident fast path for this size,
    #    single hidden step, f32 output accumulated directly into o_ref).
    out = jax.block_until_ready(linear_relu_ffn(x, w1, b1, w2, b2))
    assert out.shape == x.shape
    assert jnp.allclose(out, ref, atol=1e-4, rtol=1e-4), float(
        jnp.max(jnp.abs(out - ref)))

    # 2) Forced multi-tile run: exercises the K-loop accumulation across 4
    #    hidden slices and multiple row tiles.
    out2 = jax.block_until_ready(
        linear_relu_ffn(x, w1, b1, w2, b2, tm=128, th=128))
    assert jnp.allclose(out2, ref, atol=1e-4, rtol=1e-4), float(
        jnp.max(jnp.abs(out2 - ref)))

    # 3) bf16 activations + weights (half the HBM weight bytes, 2x MXU rate);
    #    accumulation stays f32, exercises the scratch-accumulator kernel.
    xb = x.astype(jnp.bfloat16)
    w1b, b1b, w2b, b2b = (p.astype(jnp.bfloat16) for p in (w1, b1, w2, b2))
    outb = jax.block_until_ready(linear_relu_ffn(xb, w1b, b1b, w2b, b2b))
    refb = (jnp.maximum(xb.astype(jnp.float32) @ w1b.astype(jnp.float32)
                        + b1b.astype(jnp.float32), 0.0)
            @ w2b.astype(jnp.float32) + b2b.astype(jnp.float32))
    assert outb.shape == x.shape
    assert float(jnp.max(jnp.abs(outb.astype(jnp.float32) - refb))) < 2e-1

    print("KERNEL_OK")
</pallas_src>

<mosaic_0001>
module attributes {stable_mosaic.version = 11 : i64} {
  func.func @_ffn_kernel_f32out(%arg0: i32, %arg1: i32, %arg2: memref<512x128xf32, #tpu.memory_space<vmem>>, %arg3: memref<128x512xf32, #tpu.memory_space<vmem>>, %arg4: memref<1x512xf32, #tpu.memory_space<vmem>>, %arg5: memref<512x128xf32, #tpu.memory_space<vmem>>, %arg6: memref<1x128xf32, #tpu.memory_space<vmem>>, %arg7: memref<512x128xf32, #tpu.memory_space<vmem>>) attributes {dimension_semantics = [#tpu.dimension_semantics<parallel>, #tpu.dimension_semantics<arbitrary>], iteration_bounds = array<i64: 1, 1>, scalar_prefetch = 0 : i64, scratch_operands = 0 : i64, tpu.core_type = #tpu.core_type<tc>, window_params = [{transform_indices = @transform_0, window_bounds = array<i64: 512, 128>}, {transform_indices = @transform_1, window_bounds = array<i64: 128, 512>}, {transform_indices = @transform_2, window_bounds = array<i64: 1, 512>}, {transform_indices = @transform_3, window_bounds = array<i64: 512, 128>}, {pipeline_mode = #tpu.pipeline_mode<synchronous>, transform_indices = @transform_4, window_bounds = array<i64: 1, 128>}, {transform_indices = @transform_5, window_bounds = array<i64: 512, 128>}]} {
    %c0_i32 = arith.constant 0 : i32
    %0 = arith.cmpi eq, %arg1, %c0_i32 : i32
    %1 = arith.extui %0 : i1 to i32
    %c0_i32_0 = arith.constant 0 : i32
    %2 = arith.cmpi ne, %1, %c0_i32_0 : i32
    scf.if %2 {
      %c0_14 = arith.constant 0 : index
      %c0_15 = arith.constant 0 : index
      %16 = vector.load %arg6[%c0_14, %c0_15] : memref<1x128xf32, #tpu.memory_space<vmem>>, vector<1x128xf32>
      %17 = vector.shape_cast %16 : vector<1x128xf32> to vector<1x128xf32>
      %18 = vector.broadcast %17 : vector<1x128xf32> to vector<512x128xf32>
      %c0_16 = arith.constant 0 : index
      %c0_17 = arith.constant 0 : index
      %19 = vector.load %arg7[%c0_16, %c0_17] : memref<512x128xf32, #tpu.memory_space<vmem>>, vector<512x128xf32>
      tpu.vector_store %arg7[%c0_16, %c0_17], %18 {strides = array<i32>} : memref<512x128xf32, #tpu.memory_space<vmem>>, vector<512x128xf32>,
    } else {
    }
    %c0 = arith.constant 0 : index
    %c0_1 = arith.constant 0 : index
    %3 = vector.load %arg2[%c0, %c0_1] : memref<512x128xf32, #tpu.memory_space<vmem>>, vector<512x128xf32>
    %c0_2 = arith.constant 0 : index
    %c0_3 = arith.constant 0 : index
    %4 = vector.load %arg3[%c0_2, %c0_3] : memref<128x512xf32, #tpu.memory_space<vmem>>, vector<128x512xf32>
    %cst = arith.constant dense<0.000000e+00> : vector<512x512xf32>
    %5 = tpu.matmul %3, %4, %cst {dimension_numbers = #tpu.dot_dimension_numbers<[1], [0], [0], [1], [0, 0, 1, 1], [], []>} : vector<512x128xf32>, vector<128x512xf32>, vector<512x512xf32> -> vector<512x512xf32>
    %c0_4 = arith.constant 0 : index
    %c0_5 = arith.constant 0 : index
    %6 = vector.load %arg4[%c0_4, %c0_5] : memref<1x512xf32, #tpu.memory_space<vmem>>, vector<1x512xf32>
    %7 = vector.broadcast %6 : vector<1x512xf32> to vector<512x512xf32>
    %8 = arith.addf %5, %7 : vector<512x512xf32>
    %cst_6 = arith.constant 0.000000e+00 : f32
    %9 = vector.broadcast %cst_6 : f32 to vector<512x512xf32>
    %10 = arith.maximumf %8, %9 : vector<512x512xf32>
    %c0_7 = arith.constant 0 : index
    %c0_8 = arith.constant 0 : index
    %11 = vector.load %arg7[%c0_7, %c0_8] : memref<512x128xf32, #tpu.memory_space<vmem>>, vector<512x128xf32>
    %c0_9 = arith.constant 0 : index
    %c0_10 = arith.constant 0 : index
    %12 = vector.load %arg5[%c0_9, %c0_10] : memref<512x128xf32, #tpu.memory_space<vmem>>, vector<512x128xf32>
    %cst_11 = arith.constant dense<0.000000e+00> : vector<512x128xf32>
    %13 = tpu.matmul %10, %12, %cst_11 {dimension_numbers = #tpu.dot_dimension_numbers<[1], [0], [0], [1], [0, 0, 1, 1], [], []>} : vector<512x512xf32>, vector<512x128xf32>, vector<512x128xf32> -> vector<512x128xf32>
    %14 = arith.addf %11, %13 : vector<512x128xf32>
    %c0_12 = arith.constant 0 : index
    %c0_13 = arith.constant 0 : index
    %15 = vector.load %arg7[%c0_12, %c0_13] : memref<512x128xf32, #tpu.memory_space<vmem>>, vector<512x128xf32>
    tpu.vector_store %arg7[%c0_12, %c0_13], %14 {strides = array<i32>} : memref<512x128xf32, #tpu.memory_space<vmem>>, vector<512x128xf32>,
    return
  }
  func.func @transform_0(%arg0: i32, %arg1: i32) -> (i32, i32) {
    %c0_i32 = arith.constant 0 : i32
    %c0_i32_0 = arith.constant 0 : i32
    return %arg0, %c0_i32 : i32, i32
  }
  func.func @transform_1(%arg0: i32, %arg1: i32) -> (i32, i32) {
    %c0_i32 = arith.constant 0 : i32
    %c0_i32_0 = arith.constant 0 : i32
    return %c0_i32, %arg1 : i32, i32
  }
  func.func @transform_2(%arg0: i32, %arg1: i32) -> (i32, i32) {
    %c0_i32 = arith.constant 0 : i32
    %c0_i32_0 = arith.constant 0 : i32
    return %c0_i32, %arg1 : i32, i32
  }
  func.func @transform_3(%arg0: i32, %arg1: i32) -> (i32, i32) {
    %c0_i32 = arith.constant 0 : i32
    %c0_i32_0 = arith.constant 0 : i32
    return %arg1, %c0_i32 : i32, i32
  }
  func.func @transform_4(%arg0: i32, %arg1: i32) -> (i32, i32) {
    %c0_i32 = arith.constant 0 : i32
    %c0_i32_0 = arith.constant 0 : i32
    %c0_i32_1 = arith.constant 0 : i32
    return %c0_i32, %c0_i32_0 : i32, i32
  }
  func.func @transform_5(%arg0: i32, %arg1: i32) -> (i32, i32) {
    %c0_i32 = arith.constant 0 : i32
    %c0_i32_0 = arith.constant 0 : i32
    return %arg0, %c0_i32 : i32, i32
  }
}

</mosaic_0001>

<llo_original>
// kernel: linear_relu_ffn.1
$region0: #{linear_relu_ffn.1}
  #allocation0 [shape = 'u32[]', space=smem, size = 0x4, offset = 0x4, fixed_abs, tag = 'smem constant byte address 0x4 - core index']
  #allocation1 [shape = 'u32[144,128]{1,0:T(1,128)}', space=vmem, size = 0x12000, scoped, tag = 'internal scratch']
  %s0 = inlined_call_operand.hbm [shape: f32[512,128], index: 0, kind: input, shape index: {}]
  %s1 = inlined_call_operand.hbm [shape: f32[128,512], index: 1, kind: input, shape index: {}]
  %s2 = inlined_call_operand.vmem [shape: f32[1,512], index: 2, kind: input, shape index: {}]
  %s3 = inlined_call_operand.hbm [shape: f32[512,128], index: 3, kind: input, shape index: {}]
  %s4 = inlined_call_operand.vmem [shape: f32[1,128], index: 4, kind: input, shape index: {}]
  %s5 = inlined_call_operand.hbm [shape: f32[512,128], index: 5, kind: output, shape index: {}]
  %s6 = sld [smem:[#allocation0]]
  $region46: #{linear_relu_ffn.1} parent=0
    _
  %s8 = ssub.s32 1, %s6
  %s9 = scalar_select 0, %s8, %s6
  $region1: #{linear_relu_ffn.1} parent=0
    #allocation2 [shape = 'u8[262144]{0}', space=vmem, size = 0x40000, scoped, tag = 'input window, operand 0, single buffered']
    #allocation3 [shape = 's32[1]{0}', space=sflag, size = 0x4, scoped, tag = 'scoped memory for linear_relu_ffn.1']
    #allocation4 [shape = 's32[1]{0}', space=sflag, size = 0x4, scoped, tag = 'scoped memory for linear_relu_ffn.1']
    #allocation5 [shape = 'u8[262144]{0}', space=vmem, size = 0x40000, scoped, tag = 'input window, operand 1, single buffered']
    #allocation6 [shape = 's32[1]{0}', space=sflag, size = 0x4, scoped, tag = 'scoped memory for linear_relu_ffn.1']
    #allocation7 [shape = 'u8[262144]{0}', space=vmem, size = 0x40000, scoped, tag = 'input window, operand 3, single buffered']
    #allocation8 [shape = 'u8[262144]{0}', space=vmem, size = 0x40000, scoped, tag = 'output window, operand 0, single buffered']
    %10 = vsyncpa [#allocation3], 0
    %11 = vsyncpa [#allocation6], 0
    %12 = vsyncpa [#allocation4], 0
    // Predicated region
    $region2: #{linear_relu_ffn.1} parent=1 // pred_check
      _
    $region3: #{linear_relu_ffn.1} parent=1 // pred_check_branch
      %14 = sbr.rel (0) target = $region5
    $region4: #{linear_relu_ffn.1} parent=1 // pred_region
      %s16 = ssub.s32 8192, 8192
      %17 = vsyncadd [#allocation3], %s16
      %s18 = sshll.u32 [#allocation2], 4
      %s19 = int_to_ptr.vmem [resolvable:$true] %s18
      %24 = dma.hbm_to_vmem [thread:$0]  %s0, 8192, %s19, [#allocation3], 128, 128, 8
    $region5: #{linear_relu_ffn.1} parent=1 // pred_fallthru
      _
    // Predicated region
    $region6: #{linear_relu_ffn.1} parent=1 // pred_check
      _
    $region7: #{linear_relu_ffn.1} parent=1 // pred_check_branch
      %26 = sbr.rel (0) target = $region9
    $region8: #{linear_relu_ffn.1} parent=1 // pred_region
      %s28 = ssub.s32 8192, 8192
      %29 = vsyncadd [#allocation6], %s28
      %s30 = sshll.u32 [#allocation5], 4
      %s31 = int_to_ptr.vmem [resolvable:$true] %s30
      %36 = dma.hbm_to_vmem [thread:$0]  %s1, 8192, %s31, [#allocation6], 512, 512, 32
    $region9: #{linear_relu_ffn.1} parent=1 // pred_fallthru
      _
    // Predicated region
    $region10: #{linear_relu_ffn.1} parent=1 // pred_check
      _
    $region11: #{linear_relu_ffn.1} parent=1 // pred_check_branch
      %38 = sbr.rel (0) target = $region13
    $region12: #{linear_relu_ffn.1} parent=1 // pred_region
      _
    $region13: #{linear_relu_ffn.1} parent=1 // pred_fallthru
      _
    // Predicated region
    $region14: #{linear_relu_ffn.1} parent=1 // pred_check
      _
    $region15: #{linear_relu_ffn.1} parent=1 // pred_check_branch
      %40 = sbr.rel (0) target = $region17
    $region16: #{linear_relu_ffn.1} parent=1 // pred_region
      %s42 = ssub.s32 8192, 8192
      %43 = vsyncadd [#allocation6], %s42
      %s44 = sshll.u32 [#allocation7], 4
      %s45 = int_to_ptr.vmem [resolvable:$true] %s44
      %50 = dma.hbm_to_vmem [thread:$0]  %s3, 8192, %s45, [#allocation6], 128, 128, 8
    $region17: #{linear_relu_ffn.1} parent=1 // pred_fallthru
      _
    // Predicated region
    $region18: #{linear_relu_ffn.1} parent=1 // pred_check
      _
    $region19: #{linear_relu_ffn.1} parent=1 // pred_check_branch
      %52 = sbr.rel (0) target = $region21
    $region20: #{linear_relu_ffn.1} parent=1 // pred_region
      _
    $region21: #{linear_relu_ffn.1} parent=1 // pred_fallthru
      _
    // Predicated region
    $region22: #{linear_relu_ffn.1} parent=1 // pred_check
      _
    $region23: #{linear_relu_ffn.1} parent=1 // pred_check_branch
      %54 = sbr.rel (0) target = $region25
    $region24: #{linear_relu_ffn.1} parent=1 // pred_region
      %55 = dma.done [#allocation3], 8192
    $region25: #{linear_relu_ffn.1} parent=1 // pred_fallthru
      _
    // Predicated region
    $region26: #{linear_relu_ffn.1} parent=1 // pred_check
      _
    $region27: #{linear_relu_ffn.1} parent=1 // pred_check_branch
      %57 = sbr.rel (0) target = $region29
    $region28: #{linear_relu_ffn.1} parent=1 // pred_region
      %58 = dma.done [#allocation6], 8192
    $region29: #{linear_relu_ffn.1} parent=1 // pred_fallthru
      _
    // Predicated region
    $region30: #{linear_relu_ffn.1} parent=1 // pred_check
      _
    $region31: #{linear_relu_ffn.1} parent=1 // pred_check_branch
      %60 = sbr.rel (0) target = $region33
    $region32: #{linear_relu_ffn.1} parent=1 // pred_region
      %61 = dma.done [#allocation6], 8192
    $region33: #{linear_relu_ffn.1} parent=1 // pred_fallthru
      _
    %p62 = scmp.eq.s32.totalorder 0, 0
    // Predicated region
    $region34: #{linear_relu_ffn.1} parent=1 // pred_check
      %p63 = pneg %p62
    $region35: #{linear_relu_ffn.1} parent=1 // pred_check_branch
      %65 = sbr.rel (%p63) target = $region37
    $region36: #{linear_relu_ffn.1} parent=1 // pred_region
      %v66 = vld [vmem:[%s4] sm:$0x1]
      %v68 = vlaneseq
      %v69 = vshrl.u32 %v68, 7
      %v70 = vsub.s32 0, %v69
      %v71 = vrot.slane %v66, %v70
      %73 = vst [vmem:[#allocation8] sm:$0xff] %v71
      %74 = vst [vmem:[#allocation8 + $0x8] sm:$0xff] %v71
      %75 = vst [vmem:[#allocation8 + $0x10] sm:$0xff] %v71
      %76 = vst [vmem:[#allocation8 + $0x18] sm:$0xff] %v71
      %77 = vst [vmem:[#allocation8 + $0x20] sm:$0xff] %v71
      %78 = vst [vmem:[#allocation8 + $0x28] sm:$0xff] %v71
      %79 = vst [vmem:[#allocation8 + $0x30] sm:$0xff] %v71
      %80 = vst [vmem:[#allocation8 + $0x38] sm:$0xff] %v71
      %81 = vst [vmem:[#allocation8 + $0x40] sm:$0xff] %v71
      %82 = vst [vmem:[#allocation8 + $0x48] sm:$0xff] %v71
      %83 = vst [vmem:[#allocation8 + $0x50] sm:$0xff] %v71
      %84 = vst [vmem:[#allocation8 + $0x58] sm:$0xff] %v71
      %85 = vst [vmem:[#allocation8 + $0x60] sm:$0xff] %v71
      %86 = vst [vmem:[#allocation8 + $0x68] sm:$0xff] %v71
      %87 = vst [vmem:[#allocation8 + $0x70] sm:$0xff] %v71
      %88 = vst [vmem:[#allocation8 + $0x78] sm:$0xff] %v71
      %89 = vst [vmem:[#allocation8 + $0x80] sm:$0xff] %v71
      %90 = vst [vmem:[#allocation8 + $0x88] sm:$0xff] %v71
      %91 = vst [vmem:[#allocation8 + $0x90] sm:$0xff] %v71
      %92 = vst [vmem:[#allocation8 + $0x98] sm:$0xff] %v71
      %93 = vst [vmem:[#allocation8 + $0xa0] sm:$0xff] %v71
      %94 = vst [vmem:[#allocation8 + $0xa8] sm:$0xff] %v71
      %95 = vst [vmem:[#allocation8 + $0xb0] sm:$0xff] %v71
      %96 = vst [vmem:[#allocation8 + $0xb8] sm:$0xff] %v71
      %97 = vst [vmem:[#allocation8 + $0xc0] sm:$0xff] %v71
      %98 = vst [vmem:[#allocation8 + $0xc8] sm:$0xff] %v71
      %99 = vst [vmem:[#allocation8 + $0xd0] sm:$0xff] %v71
      %100 = vst [vmem:[#allocation8 + $0xd8] sm:$0xff] %v71
      %101 = vst [vmem:[#allocation8 + $0xe0] sm:$0xff] %v71
      %102 = vst [vmem:[#allocation8 + $0xe8] sm:$0xff] %v71
      %103 = vst [vmem:[#allocation8 + $0xf0] sm:$0xff] %v71
      %104 = vst [vmem:[#allocation8 + $0xf8] sm:$0xff] %v71
      %105 = vst [vmem:[#allocation8 + $0x100] sm:$0xff] %v71
      %106 = vst [vmem:[#allocation8 + $0x108] sm:$0xff] %v71
      %107 = vst [vmem:[#allocation8 + $0x110] sm:$0xff] %v71
      %108 = vst [vmem:[#allocation8 + $0x118] sm:$0xff] %v71
      %109 = vst [vmem:[#allocation8 + $0x120] sm:$0xff] %v71
      %110 = vst [vmem:[#allocation8 + $0x128] sm:$0xff] %v71
      %111 = vst [vmem:[#allocation8 + $0x130] sm:$0xff] %v71
      %112 = vst [vmem:[#allocation8 + $0x138] sm:$0xff] %v71
      %113 = vst [vmem:[#allocation8 + $0x140] sm:$0xff] %v71
      %114 = vst [vmem:[#allocation8 + $0x148] sm:$0xff] %v71
      %115 = vst [vmem:[#allocation8 + $0x150] sm:$0xff] %v71
      %116 = vst [vmem:[#allocation8 + $0x158] sm:$0xff] %v71
      %117 = vst [vmem:[#allocation8 + $0x160] sm:$0xff] %v71
      %118 = vst [vmem:[#allocation8 + $0x168] sm:$0xff] %v71
      %119 = vst [vmem:[#allocation8 + $0x170] sm:$0xff] %v71
      %120 = vst [vmem:[#allocation8 + $0x178] sm:$0xff] %v71
      %121 = vst [vmem:[#allocation8 + $0x180] sm:$0xff] %v71
      %122 = vst [vmem:[#allocation8 + $0x188] sm:$0xff] %v71
      %123 = vst [vmem:[#allocation8 + $0x190] sm:$0xff] %v71
      %124 = vst [vmem:[#allocation8 + $0x198] sm:$0xff] %v71
      %125 = vst [vmem:[#allocation8 + $0x1a0] sm:$0xff] %v71
      %126 = vst [vmem:[#allocation8 + $0x1a8] sm:$0xff] %v71
      %127 = vst [vmem:[#allocation8 + $0x1b0] sm:$0xff] %v71
      %128 = vst [vmem:[#allocation8 + $0x1b8] sm:$0xff] %v71
      %129 = vst [vmem:[#allocation8 + $0x1c0] sm:$0xff] %v71
      %130 = vst [vmem:[#allocation8 + $0x1c8] sm:$0xff] %v71
      %131 = vst [vmem:[#allocation8 + $0x1d0] sm:$0xff] %v71
      %132 = vst [vmem:[#allocation8 + $0x1d8] sm:$0xff] %v71
      %133 = vst [vmem:[#allocation8 + $0x1e0] sm:$0xff] %v71
      %134 = vst [vmem:[#allocation8 + $0x1e8] sm:$0xff] %v71
      %135 = vst [vmem:[#allocation8 + $0x1f0] sm:$0xff] %v71
      %136 = vst [vmem:[#allocation8 + $0x1f8] sm:$0xff] %v71
    $region37: #{linear_relu_ffn.1} parent=1 // pred_fallthru
      _
    %v137 = vld [vmem:[#allocation2] sm:$0xff]
    %v138 = vld [vmem:[#allocation2 + $0x8] sm:$0xff]
    %v139 = vld [vmem:[#allocation2 + $0x10] sm:$0xff]
    %v140 = vld [vmem:[#allocation2 + $0x18] sm:$0xff]
    %v141 = vld [vmem:[#allocation2 + $0x20] sm:$0xff]
    %v142 = vld [vmem:[#allocation2 + $0x28] sm:$0xff]
    %v143 = vld [vmem:[#allocation2 + $0x30] sm:$0xff]
    %v144 = vld [vmem:[#allocation2 + $0x38] sm:$0xff]
    %v145 = vld [vmem:[#allocation2 + $0x40] sm:$0xff]
    %v146 = vld [vmem:[#allocation2 + $0x48] sm:$0xff]
    %v147 = vld [vmem:[#allocation2 + $0x50] sm:$0xff]
    %v148 = vld [vmem:[#allocation2 + $0x58] sm:$0xff]
    %v149 = vld [vmem:[#allocation2 + $0x60] sm:$0xff]
    %v150 = vld [vmem:[#allocation2 + $0x68] sm:$0xff]
    %v151 = vld [vmem:[#allocation2 + $0x70] sm:$0xff]
    %v152 = vld [vmem:[#allocation2 + $0x78] sm:$0xff]
    %v153 = vld [vmem:[#allocation2 + $0x80] sm:$0xff]
    %v154 = vld [vmem:[#allocation2 + $0x88] sm:$0xff]
    %v155 = vld [vmem:[#allocation2 + $0x90] sm:$0xff]
    %v156 = vld [vmem:[#allocation2 + $0x98] sm:$0xff]
    %v157 = vld [vmem:[#allocation2 + $0xa0] sm:$0xff]
    %v158 = vld [vmem:[#allocation2 + $0xa8] sm:$0xff]
    %v159 = vld [vmem:[#allocation2 + $0xb0] sm:$0xff]
    %v160 = vld [vmem:[#allocation2 + $0xb8] sm:$0xff]
    %v161 = vld [vmem:[#allocation2 + $0xc0] sm:$0xff]
    %v162 = vld [vmem:[#allocation2 + $0xc8] sm:$0xff]
    %v163 = vld [vmem:[#allocation2 + $0xd0] sm:$0xff]
    %v164 = vld [vmem:[#allocation2 + $0xd8] sm:$0xff]
    %v165 = vld [vmem:[#allocation2 + $0xe0] sm:$0xff]
    %v166 = vld [vmem:[#allocation2 + $0xe8] sm:$0xff]
    %v167 = vld [vmem:[#allocation2 + $0xf0] sm:$0xff]
    %v168 = vld [vmem:[#allocation2 + $0xf8] sm:$0xff]
    %v169 = vld [vmem:[#allocation2 + $0x100] sm:$0xff]
    %v170 = vld [vmem:[#allocation2 + $0x108] sm:$0xff]
    %v171 = vld [vmem:[#allocation2 + $0x110] sm:$0xff]
    %v172 = vld [vmem:[#allocation2 + $0x118] sm:$0xff]
    %v173 = vld [vmem:[#allocation2 + $0x120] sm:$0xff]
    %v174 = vld [vmem:[#allocation2 + $0x128] sm:$0xff]
    %v175 = vld [vmem:[#allocation2 + $0x130] sm:$0xff]
    %v176 = vld [vmem:[#allocation2 + $0x138] sm:$0xff]
    %v177 = vld [vmem:[#allocation2 + $0x140] sm:$0xff]
    %v178 = vld [vmem:[#allocation2 + $0x148] sm:$0xff]
    %v179 = vld [vmem:[#allocation2 + $0x150] sm:$0xff]
    %v180 = vld [vmem:[#allocation2 + $0x158] sm:$0xff]
    %v181 = vld [vmem:[#allocation2 + $0x160] sm:$0xff]
    %v182 = vld [vmem:[#allocation2 + $0x168] sm:$0xff]
    %v183 = vld [vmem:[#allocation2 + $0x170] sm:$0xff]
    %v184 = vld [vmem:[#allocation2 + $0x178] sm:$0xff]
    %v185 = vld [vmem:[#allocation2 + $0x180] sm:$0xff]
    %v186 = vld [vmem:[#allocation2 + $0x188] sm:$0xff]
    %v187 = vld [vmem:[#allocation2 + $0x190] sm:$0xff]
    %v188 = vld [vmem:[#allocation2 + $0x198] sm:$0xff]
    %v189 = vld [vmem:[#allocation2 + $0x1a0] sm:$0xff]
    %v190 = vld [vmem:[#allocation2 + $0x1a8] sm:$0xff]
    %v191 = vld [vmem:[#allocation2 + $0x1b0] sm:$0xff]
    %v192 = vld [vmem:[#allocation2 + $0x1b8] sm:$0xff]
    %v193 = vld [vmem:[#allocation2 + $0x1c0] sm:$0xff]
    %v194 = vld [vmem:[#allocation2 + $0x1c8] sm:$0xff]
    %v195 = vld [vmem:[#allocation2 + $0x1d0] sm:$0xff]
    %v196 = vld [vmem:[#allocation2 + $0x1d8] sm:$0xff]
    %v197 = vld [vmem:[#allocation2 + $0x1e0] sm:$0xff]
    %v198 = vld [vmem:[#allocation2 + $0x1e8] sm:$0xff]
    %v199 = vld [vmem:[#allocation2 + $0x1f0] sm:$0xff]
    %v200 = vld [vmem:[#allocation2 + $0x1f8] sm:$0xff]
    %v201 = vld [vmem:[#allocation5] sm:$0xff]
    %v202 = vld [vmem:[#allocation5 + $0x8] sm:$0xff]
    %v203 = vld [vmem:[#allocation5 + $0x10] sm:$0xff]
    %v204 = vld [vmem:[#allocation5 + $0x18] sm:$0xff]
    %v205 = vld [vmem:[#allocation5 + $0x20] sm:$0xff]
    %v206 = vld [vmem:[#allocation5 + $0x28] sm:$0xff]
    %v207 = vld [vmem:[#allocation5 + $0x30] sm:$0xff]
    %v208 = vld [vmem:[#allocation5 + $0x38] sm:$0xff]
    %v209 = vld [vmem:[#allocation5 + $0x40] sm:$0xff]
    %v210 = vld [vmem:[#allocation5 + $0x48] sm:$0xff]
    %v211 = vld [vmem:[#allocation5 + $0x50] sm:$0xff]
    %v212 = vld [vmem:[#allocation5 + $0x58] sm:$0xff]
    %v213 = vld [vmem:[#allocation5 + $0x60] sm:$0xff]
    %v214 = vld [vmem:[#allocation5 + $0x68] sm:$0xff]
    %v215 = vld [vmem:[#allocation5 + $0x70] sm:$0xff]
    %v216 = vld [vmem:[#allocation5 + $0x78] sm:$0xff]
    %v217 = vld [vmem:[#allocation5 + $0x80] sm:$0xff]
    %v218 = vld [vmem:[#allocation5 + $0x88] sm:$0xff]
    %v219 = vld [vmem:[#allocation5 + $0x90] sm:$0xff]
    %v220 = vld [vmem:[#allocation5 + $0x98] sm:$0xff]
    %v221 = vld [vmem:[#allocation5 + $0xa0] sm:$0xff]
    %v222 = vld [vmem:[#allocation5 + $0xa8] sm:$0xff]
    %v223 = vld [vmem:[#allocation5 + $0xb0] sm:$0xff]
    %v224 = vld [vmem:[#allocation5 + $0xb8] sm:$0xff]
    %v225 = vld [vmem:[#allocation5 + $0xc0] sm:$0xff]
    %v226 = vld [vmem:[#allocation5 + $0xc8] sm:$0xff]
    %v227 = vld [vmem:[#allocation5 + $0xd0] sm:$0xff]
    %v228 = vld [vmem:[#allocation5 + $0xd8] sm:$0xff]
    %v229 = vld [vmem:[#allocation5 + $0xe0] sm:$0xff]
    %v230 = vld [vmem:[#allocation5 + $0xe8] sm:$0xff]
    %v231 = vld [vmem:[#allocation5 + $0xf0] sm:$0xff]
    %v232 = vld [vmem:[#allocation5 + $0xf8] sm:$0xff]
    %v233 = vld [vmem:[#allocation5 + $0x100] sm:$0xff]
    %v234 = vld [vmem:[#allocation5 + $0x108] sm:$0xff]
    %v235 = vld [vmem:[#allocation5 + $0x110] sm:$0xff]
    %v236 = vld [vmem:[#allocation5 + $0x118] sm:$0xff]
    %v237 = vld [vmem:[#allocation5 + $0x120] sm:$0xff]
    %v238 = vld [vmem:[#allocation5 + $0x128] sm:$0xff]
    %v239 = vld [vmem:[#allocation5 + $0x130] sm:$0xff]
    %v240 = vld [vmem:[#allocation5 + $0x138] sm:$0xff]
    %v241 = vld [vmem:[#allocation5 + $0x140] sm:$0xff]
    %v242 = vld [vmem:[#allocation5 + $0x148] sm:$0xff]
    %v243 = vld [vmem:[#allocation5 + $0x150] sm:$0xff]
    %v244 = vld [vmem:[#allocation5 + $0x158] sm:$0xff]
    %v245 = vld [vmem:[#allocation5 + $0x160] sm:$0xff]
    %v246 = vld [vmem:[#allocation5 + $0x168] sm:$0xff]
    %v247 = vld [vmem:[#allocation5 + $0x170] sm:$0xff]
    %v248 = vld [vmem:[#allocation5 + $0x178] sm:$0xff]
    %v249 = vld [vmem:[#allocation5 + $0x180] sm:$0xff]
    %v250 = vld [vmem:[#allocation5 + $0x188] sm:$0xff]
    %v251 = vld [vmem:[#allocation5 + $0x190] sm:$0xff]
    %v252 = vld [vmem:[#allocation5 + $0x198] sm:$0xff]
    %v253 = vld [vmem:[#allocation5 + $0x1a0] sm:$0xff]
    %v254 = vld [vmem:[#allocation5 + $0x1a8] sm:$0xff]
    %v255 = vld [vmem:[#allocation5 + $0x1b0] sm:$0xff]
    %v256 = vld [vmem:[#allocation5 + $0x1b8] sm:$0xff]
    %v257 = vld [vmem:[#allocation5 + $0x1c0] sm:$0xff]
    %v258 = vld [vmem:[#allocation5 + $0x1c8] sm:$0xff]
    %v259 = vld [vmem:[#allocation5 + $0x1d0] sm:$0xff]
    %v260 = vld [vmem:[#allocation5 + $0x1d8] sm:$0xff]
    %v261 = vld [vmem:[#allocation5 + $0x1e0] sm:$0xff]
    %v262 = vld [vmem:[#allocation5 + $0x1e8] sm:$0xff]
    %v263 = vld [vmem:[#allocation5 + $0x1f0] sm:$0xff]
    %v264 = vld [vmem:[#allocation5 + $0x1f8] sm:$0xff]
    %v265 = vld [vmem:[%s2] sm:$0xf]
    %v267 = vlaneseq
    %v268 = vshrl.u32 %v267, 7
    %v269 = vsub.s32 0, %v268
    %v270 = vrot.slane %v265, %v269
    %v271 = vlaneseq
    %v272 = vshrl.u32 %v271, 7
    %v273 = vsub.s32 1, %v272
    %v274 = vrot.slane %v265, %v273
    %v275 = vlaneseq
    %v276 = vshrl.u32 %v275, 7
    %v277 = vsub.s32 2, %v276
    %v278 = vrot.slane %v265, %v277
    %v279 = vlaneseq
    %v280 = vshrl.u32 %v279, 7
    %v281 = vsub.s32 3, %v280
    %v282 = vrot.slane %v265, %v281
    %287 = vmatprep.subr.mxu0 %v262
    %288 = vmatpush1.msra.mxu0 %v261
    %289 = vmatprep.subr.mxu0 %v258
    %290 = vmatpush1.msra.mxu0 %v257
    %291 = vmatprep.subr.mxu0 %v254
    %292 = vmatpush1.msra.mxu0 %v253
    %293 = vmatprep.subr.mxu0 %v250
    %294 = vmatpush1.msra.mxu0 %v249
    %295 = vmatprep.subr.mxu0 %v246
    %296 = vmatpush1.msra.mxu0 %v245
    %297 = vmatprep.subr.mxu0 %v242
    %298 = vmatpush1.msra.mxu0 %v241
    %299 = vmatprep.subr.mxu0 %v238
    %300 = vmatpush1.msra.mxu0 %v237
    %301 = vmatprep.subr.mxu0 %v234
    %302 = vmatpush1.msra.mxu0 %v233
    %303 = vmatprep.subr.mxu0 %v230
    %304 = vmatpush1.msra.mxu0 %v229
    %305 = vmatprep.subr.mxu0 %v226
    %306 = vmatpush1.msra.mxu0 %v225
    %307 = vmatprep.subr.mxu0 %v222
    %308 = vmatpush1.msra.mxu0 %v221
    %309 = vmatprep.subr.mxu0 %v218
    %310 = vmatpush1.msra.mxu0 %v217
    %311 = vmatprep.subr.mxu0 %v214
    %312 = vmatpush1.msra.mxu0 %v213
    %313 = vmatprep.subr.mxu0 %v210
    %314 = vmatpush1.msra.mxu0 %v209
    %315 = vmatprep.subr.mxu0 %v206
    %316 = vmatpush1.msra.mxu0 %v205
    %317 = vmatprep.subr.mxu0 %v202
    %318 = vmatpush1.msra.mxu0 %v201
    %319 = vmatprep.subr.mxu0 0.0
    %320 = vmatpush2.msra.mxu0 0.0
    %321 = vmatprep.subr.mxu0 0.0
    %322 = vmatpush2.msra.mxu0 0.0
    %323 = vmatprep.subr.mxu0 0.0
    %324 = vmatpush2.msra.mxu0 0.0
    %325 = vmatprep.subr.mxu0 0.0
    %326 = vmatpush2.msra.mxu0 0.0
    %327 = vmatprep.subr.mxu0 0.0
    %328 = vmatpush2.msra.mxu0 0.0
    %329 = vmatprep.subr.mxu0 0.0
    %330 = vmatpush2.msra.mxu0 0.0
    %331 = vmatprep.subr.mxu0 0.0
    %332 = vmatpush2.msra.mxu0 0.0
    %333 = vmatprep.subr.mxu0 0.0
    %334 = vmatpush2.msra.mxu0 0.0
    %335 = vmatprep.subr.mxu0 0.0
    %336 = vmatpush2.msra.mxu0 0.0
    %337 = vmatprep.subr.mxu0 0.0
    %338 = vmatpush2.msra.mxu0 0.0
    %339 = vmatprep.subr.mxu0 0.0
    %340 = vmatpush2.msra.mxu0 0.0
    %341 = vmatprep.subr.mxu0 0.0
    %342 = vmatpush2.msra.mxu0 0.0
    %343 = vmatprep.subr.mxu0 0.0
    %344 = vmatpush2.msra.mxu0 0.0
    %345 = vmatprep.subr.mxu0 0.0
    %346 = vmatpush2.msra.mxu0 0.0
    %347 = vmatprep.subr.mxu0 0.0
    %348 = vmatpush2.msra.mxu0 0.0
    %349 = vmatprep.subr.mxu0 0.0
    %350 = vmatpush2.msra.mxu0 0.0
    %351 = vmatprep.mubr.f32.mxu0 0.0
    %352 = vmatmul.mubr.f32.gmra.mxu0 %v137
    %v353 = vpop.f32.mrf.mxu0
    %v354 = vadd.f32 %v270, %v353
    %v355 = vpop.f32.mrf.mxu0
    %v356 = vadd.f32 %v274, %v355
    %357 = vmatprep.mubr.f32.mxu0 0.0
    %358 = vmatmul.mubr.f32.gmra.mxu0 %v138
    %v359 = vpop.f32.mrf.mxu0
    %v360 = vadd.f32 %v270, %v359
    %v361 = vpop.f32.mrf.mxu0
    %v362 = vadd.f32 %v274, %v361
    %363 = vmatprep.mubr.f32.mxu0 0.0
    %364 = vmatmul.mubr.f32.gmra.mxu0 %v139
    %v365 = vpop.f32.mrf.mxu0
    %v366 = vadd.f32 %v270, %v365
    %v367 = vpop.f32.mrf.mxu0
    %v368 = vadd.f32 %v274, %v367
    %369 = vmatprep.mubr.f32.mxu0 0.0
    %370 = vmatmul.mubr.f32.gmra.mxu0 %v140
    %v371 = vpop.f32.mrf.mxu0
    %v372 = vadd.f32 %v270, %v371
    %v373 = vpop.f32.mrf.mxu0
    %v374 = vadd.f32 %v274, %v373
    %375 = vmatprep.mubr.f32.mxu0 0.0
    %376 = vmatmul.mubr.f32.gmra.mxu0 %v141
    %v377 = vpop.f32.mrf.mxu0
    %v378 = vadd.f32 %v270, %v377
    %v379 = vpop.f32.mrf.mxu0
    %v380 = vadd.f32 %v274, %v379
    %381 = vmatprep.mubr.f32.mxu0 0.0
    %382 = vmatmul.mubr.f32.gmra.mxu0 %v142
    %v383 = vpop.f32.mrf.mxu0
    %v384 = vadd.f32 %v270, %v383
    %v385 = vpop.f32.mrf.mxu0
    %v386 = vadd.f32 %v274, %v385
    %387 = vmatprep.mubr.f32.mxu0 0.0
    %388 = vmatmul.mubr.f32.gmra.mxu0 %v143
    %v389 = vpop.f32.mrf.mxu0
    %v390 = vadd.f32 %v270, %v389
    %v391 = vpop.f32.mrf.mxu0
    %v392 = vadd.f32 %v274, %v391
    %393 = vmatprep.mubr.f32.mxu0 0.0
    %394 = vmatmul.mubr.f32.gmra.mxu0 %v144
    %v395 = vpop.f32.mrf.mxu0
    %v396 = vadd.f32 %v270, %v395
    %v397 = vpop.f32.mrf.mxu0
    %v398 = vadd.f32 %v274, %v397
    %399 = vmatprep.mubr.f32.mxu0 0.0
    %400 = vmatmul.mubr.f32.gmra.mxu0 %v145
    %v401 = vpop.f32.mrf.mxu0
    %v402 = vadd.f32 %v270, %v401
    %v403 = vpop.f32.mrf.mxu0
    %v404 = vadd.f32 %v274, %v403
    %405 = vmatprep.mubr.f32.mxu0 0.0
    %406 = vmatmul.mubr.f32.gmra.mxu0 %v146
    %v407 = vpop.f32.mrf.mxu0
    %v408 = vadd.f32 %v270, %v407
    %v409 = vpop.f32.mrf.mxu0
    %v410 = vadd.f32 %v274, %v409
    %411 = vmatprep.mubr.f32.mxu0 0.0
    %412 = vmatmul.mubr.f32.gmra.mxu0 %v147
    %v413 = vpop.f32.mrf.mxu0
    %v414 = vadd.f32 %v270, %v413
    %v415 = vpop.f32.mrf.mxu0
    %v416 = vadd.f32 %v274, %v415
    %417 = vmatprep.mubr.f32.mxu0 0.0
    %418 = vmatmul.mubr.f32.gmra.mxu0 %v148
    %v419 = vpop.f32.mrf.mxu0
    %v420 = vadd.f32 %v270, %v419
    %v421 = vpop.f32.mrf.mxu0
    %v422 = vadd.f32 %v274, %v421
    %423 = vmatprep.mubr.f32.mxu0 0.0
    %424 = vmatmul.mubr.f32.gmra.mxu0 %v149
    %v425 = vpop.f32.mrf.mxu0
    %v426 = vadd.f32 %v270, %v425
    %v427 = vpop.f32.mrf.mxu0
    %v428 = vadd.f32 %v274, %v427
    %429 = vmatprep.mubr.f32.mxu0 0.0
    %430 = vmatmul.mubr.f32.gmra.mxu0 %v150
    %v431 = vpop.f32.mrf.mxu0
    %v432 = vadd.f32 %v270, %v431
    %v433 = vpop.f32.mrf.mxu0
    %v434 = vadd.f32 %v274, %v433
    %435 = vmatprep.mubr.f32.mxu0 0.0
    %436 = vmatmul.mubr.f32.gmra.mxu0 %v151
    %v437 = vpop.f32.mrf.mxu0
    %v438 = vadd.f32 %v270, %v437
    %v439 = vpop.f32.mrf.mxu0
    %v440 = vadd.f32 %v274, %v439
    %441 = vmatprep.mubr.f32.mxu0 0.0
    %442 = vmatmul.mubr.f32.gmra.mxu0 %v152
    %v443 = vpop.f32.mrf.mxu0
    %v444 = vadd.f32 %v270, %v443
    %v445 = vpop.f32.mrf.mxu0
    %v446 = vadd.f32 %v274, %v445
    %447 = vmatprep.mubr.f32.mxu0 0.0
    %448 = vmatmul.mubr.f32.gmra.mxu0 %v153
    %v449 = vpop.f32.mrf.mxu0
    %v450 = vadd.f32 %v270, %v449
    %v451 = vpop.f32.mrf.mxu0
    %v452 = vadd.f32 %v274, %v451
    %453 = vmatprep.mubr.f32.mxu0 0.0
    %454 = vmatmul.mubr.f32.gmra.mxu0 %v154
    %v455 = vpop.f32.mrf.mxu0
    %v456 = vadd.f32 %v270, %v455
    %v457 = vpop.f32.mrf.mxu0
    %v458 = vadd.f32 %v274, %v457
    %459 = vmatprep.mubr.f32.mxu0 0.0
    %460 = vmatmul.mubr.f32.gmra.mxu0 %v155
    %v461 = vpop.f32.mrf.mxu0
    %v462 = vadd.f32 %v270, %v461
    %v463 = vpop.f32.mrf.mxu0
    %v464 = vadd.f32 %v274, %v463
    %465 = vmatprep.mubr.f32.mxu0 0.0
    %466 = vmatmul.mubr.f32.gmra.mxu0 %v156
    %v467 = vpop.f32.mrf.mxu0
    %v468 = vadd.f32 %v270, %v467
    %v469 = vpop.f32.mrf.mxu0
    %v470 = vadd.f32 %v274, %v469
    %471 = vmatprep.mubr.f32.mxu0 0.0
    %472 = vmatmul.mubr.f32.gmra.mxu0 %v157
    %v473 = vpop.f32.mrf.mxu0
    %v474 = vadd.f32 %v270, %v473
    %v475 = vpop.f32.mrf.mxu0
    %v476 = vadd.f32 %v274, %v475
    %477 = vmatprep.mubr.f32.mxu0 0.0
    %478 = vmatmul.mubr.f32.gmra.mxu0 %v158
    %v479 = vpop.f32.mrf.mxu0
    %v480 = vadd.f32 %v270, %v479
    %v481 = vpop.f32.mrf.mxu0
    %v482 = vadd.f32 %v274, %v481
    %483 = vmatprep.mubr.f32.mxu0 0.0
    %484 = vmatmul.mubr.f32.gmra.mxu0 %v159
    %v485 = vpop.f32.mrf.mxu0
    %v486 = vadd.f32 %v270, %v485
    %v487 = vpop.f32.mrf.mxu0
    %v488 = vadd.f32 %v274, %v487
    %489 = vmatprep.mubr.f32.mxu0 0.0
    %490 = vmatmul.mubr.f32.gmra.mxu0 %v160
    %v491 = vpop.f32.mrf.mxu0
    %v492 = vadd.f32 %v270, %v491
    %v493 = vpop.f32.mrf.mxu0
    %v494 = vadd.f32 %v274, %v493
    %495 = vmatprep.mubr.f32.mxu0 0.0
    %496 = vmatmul.mubr.f32.gmra.mxu0 %v161
    %v497 = vpop.f32.mrf.mxu0
    %v498 = vadd.f32 %v270, %v497
    %v499 = vpop.f32.mrf.mxu0
    %v500 = vadd.f32 %v274, %v499
    %501 = vmatprep.mubr.f32.mxu0 0.0
    %502 = vmatmul.mubr.f32.gmra.mxu0 %v162
    %v503 = vpop.f32.mrf.mxu0
    %v504 = vadd.f32 %v270, %v503
    %v505 = vpop.f32.mrf.mxu0
    %v506 = vadd.f32 %v274, %v505
    %507 = vmatprep.mubr.f32.mxu0 0.0
    %508 = vmatmul.mubr.f32.gmra.mxu0 %v163
    %v509 = vpop.f32.mrf.mxu0
    %v510 = vadd.f32 %v270, %v509
    %v511 = vpop.f32.mrf.mxu0
    %v512 = vadd.f32 %v274, %v511
    %513 = vmatprep.mubr.f32.mxu0 0.0
    %514 = vmatmul.mubr.f32.gmra.mxu0 %v164
    %v515 = vpop.f32.mrf.mxu0
    %v516 = vadd.f32 %v270, %v515
    %v517 = vpop.f32.mrf.mxu0
    %v518 = vadd.f32 %v274, %v517
    %519 = vmatprep.mubr.f32.mxu0 0.0
    %520 = vmatmul.mubr.f32.gmra.mxu0 %v165
    %v521 = vpop.f32.mrf.mxu0
    %v522 = vadd.f32 %v270, %v521
    %v523 = vpop.f32.mrf.mxu0
    %v524 = vadd.f32 %v274, %v523
    %525 = vmatprep.mubr.f32.mxu0 0.0
    %526 = vmatmul.mubr.f32.gmra.mxu0 %v166
    %v527 = vpop.f32.mrf.mxu0
    %v528 = vadd.f32 %v270, %v527
    %v529 = vpop.f32.mrf.mxu0
    %v530 = vadd.f32 %v274, %v529
    %531 = vmatprep.mubr.f32.mxu0 0.0
    %532 = vmatmul.mubr.f32.gmra.mxu0 %v167
    %v533 = vpop.f32.mrf.mxu0
    %v534 = vadd.f32 %v270, %v533
    %v535 = vpop.f32.mrf.mxu0
    %v536 = vadd.f32 %v274, %v535
    %537 = vmatprep.mubr.f32.mxu0 0.0
    %538 = vmatmul.mubr.f32.gmra.mxu0 %v168
    %v539 = vpop.f32.mrf.mxu0
    %v540 = vadd.f32 %v270, %v539
    %v541 = vpop.f32.mrf.mxu0
    %v542 = vadd.f32 %v274, %v541
    %543 = vmatprep.mubr.f32.mxu0 0.0
    %544 = vmatmul.mubr.f32.gmra.mxu0 %v169
    %v545 = vpop.f32.mrf.mxu0
    %v546 = vadd.f32 %v270, %v545
    %v547 = vpop.f32.mrf.mxu0
    %v548 = vadd.f32 %v274, %v547
    %549 = vmatprep.mubr.f32.mxu0 0.0
    %550 = vmatmul.mubr.f32.gmra.mxu0 %v170
    %v551 = vpop.f32.mrf.mxu0
    %v552 = vadd.f32 %v270, %v551
    %v553 = vpop.f32.mrf.mxu0
    %v554 = vadd.f32 %v274, %v553
    %555 = vmatprep.mubr.f32.mxu0 0.0
    %556 = vmatmul.mubr.f32.gmra.mxu0 %v171
    %v557 = vpop.f32.mrf.mxu0
    %v558 = vadd.f32 %v270, %v557
    %v559 = vpop.f32.mrf.mxu0
    %v560 = vadd.f32 %v274, %v559
    %561 = vmatprep.mubr.f32.mxu0 0.0
    %562 = vmatmul.mubr.f32.gmra.mxu0 %v172
    %v563 = vpop.f32.mrf.mxu0
    %v564 = vadd.f32 %v270, %v563
    %v565 = vpop.f32.mrf.mxu0
    %v566 = vadd.f32 %v274, %v565
    %567 = vmatprep.mubr.f32.mxu0 0.0
    %568 = vmatmul.mubr.f32.gmra.mxu0 %v173
    %v569 = vpop.f32.mrf.mxu0
    %v570 = vadd.f32 %v270, %v569
    %v571 = vpop.f32.mrf.mxu0
    %v572 = vadd.f32 %v274, %v571
    %573 = vmatprep.mubr.f32.mxu0 0.0
    %574 = vmatmul.mubr.f32.gmra.mxu0 %v174
    %v575 = vpop.f32.mrf.mxu0
    %v576 = vadd.f32 %v270, %v575
    %v577 = vpop.f32.mrf.mxu0
    %v578 = vadd.f32 %v274, %v577
    %579 = vmatprep.mubr.f32.mxu0 0.0
    %580 = vmatmul.mubr.f32.gmra.mxu0 %v175
    %v581 = vpop.f32.mrf.mxu0
    %v582 = vadd.f32 %v270, %v581
    %v583 = vpop.f32.mrf.mxu0
    %v584 = vadd.f32 %v274, %v583
    %585 = vmatprep.mubr.f32.mxu0 0.0
    %586 = vmatmul.mubr.f32.gmra.mxu0 %v176
    %v587 = vpop.f32.mrf.mxu0
    %v588 = vadd.f32 %v270, %v587
    %v589 = vpop.f32.mrf.mxu0
    %v590 = vadd.f32 %v274, %v589
    %591 = vmatprep.mubr.f32.mxu0 0.0
    %592 = vmatmul.mubr.f32.gmra.mxu0 %v177
    %v593 = vpop.f32.mrf.mxu0
    %v594 = vadd.f32 %v270, %v593
    %v595 = vpop.f32.mrf.mxu0
    %v596 = vadd.f32 %v274, %v595
    %597 = vmatprep.mubr.f32.mxu0 0.0
    %598 = vmatmul.mubr.f32.gmra.mxu0 %v178
    %v599 = vpop.f32.mrf.mxu0
    %v600 = vadd.f32 %v270, %v599
    %v601 = vpop.f32.mrf.mxu0
    %v602 = vadd.f32 %v274, %v601
    %603 = vmatprep.mubr.f32.mxu0 0.0
    %604 = vmatmul.mubr.f32.gmra.mxu0 %v179
    %v605 = vpop.f32.mrf.mxu0
    %v606 = vadd.f32 %v270, %v605
    %v607 = vpop.f32.mrf.mxu0
    %v608 = vadd.f32 %v274, %v607
    %609 = vmatprep.mubr.f32.mxu0 0.0
    %610 = vmatmul.mubr.f32.gmra.mxu0 %v180
    %v611 = vpop.f32.mrf.mxu0
    %v612 = vadd.f32 %v270, %v611
    %v613 = vpop.f32.mrf.mxu0
    %v614 = vadd.f32 %v274, %v613
    %615 = vmatprep.mubr.f32.mxu0 0.0
    %616 = vmatmul.mubr.f32.gmra.mxu0 %v181
    %v617 = vpop.f32.mrf.mxu0
    %v618 = vadd.f32 %v270, %v617
    %v619 = vpop.f32.mrf.mxu0
    %v620 = vadd.f32 %v274, %v619
    %621 = vmatprep.mubr.f32.mxu0 0.0
    %622 = vmatmul.mubr.f32.gmra.mxu0 %v182
    %v623 = vpop.f32.mrf.mxu0
    %v624 = vadd.f32 %v270, %v623
    %v625 = vpop.f32.mrf.mxu0
    %v626 = vadd.f32 %v274, %v625
    %627 = vmatprep.mubr.f32.mxu0 0.0
    %628 = vmatmul.mubr.f32.gmra.mxu0 %v183
    %v629 = vpop.f32.mrf.mxu0
    %v630 = vadd.f32 %v270, %v629
    %v631 = vpop.f32.mrf.mxu0
    %v632 = vadd.f32 %v274, %v631
    %633 = vmatprep.mubr.f32.mxu0 0.0
    %634 = vmatmul.mubr.f32.gmra.mxu0 %v184
    %v635 = vpop.f32.mrf.mxu0
    %v636 = vadd.f32 %v270, %v635
    %v637 = vpop.f32.mrf.mxu0
    %v638 = vadd.f32 %v274, %v637
    %639 = vmatprep.mubr.f32.mxu0 0.0
    %640 = vmatmul.mubr.f32.gmra.mxu0 %v185
    %v641 = vpop.f32.mrf.mxu0
    %v642 = vadd.f32 %v270, %v641
    %v643 = vpop.f32.mrf.mxu0
    %v644 = vadd.f32 %v274, %v643
    %645 = vmatprep.mubr.f32.mxu0 0.0
    %646 = vmatmul.mubr.f32.gmra.mxu0 %v186
    %v647 = vpop.f32.mrf.mxu0
    %v648 = vadd.f32 %v270, %v647
    %v649 = vpop.f32.mrf.mxu0
    %v650 = vadd.f32 %v274, %v649
    %651 = vmatprep.mubr.f32.mxu0 0.0
    %652 = vmatmul.mubr.f32.gmra.mxu0 %v187
    %v653 = vpop.f32.mrf.mxu0
    %v654 = vadd.f32 %v270, %v653
    %v655 = vpop.f32.mrf.mxu0
    %v656 = vadd.f32 %v274, %v655
    %657 = vmatprep.mubr.f32.mxu0 0.0
    %658 = vmatmul.mubr.f32.gmra.mxu0 %v188
    %v659 = vpop.f32.mrf.mxu0
    %v660 = vadd.f32 %v270, %v659
    %v661 = vpop.f32.mrf.mxu0
    %v662 = vadd.f32 %v274, %v661
    %663 = vmatprep.mubr.f32.mxu0 0.0
    %664 = vmatmul.mubr.f32.gmra.mxu0 %v189
    %v665 = vpop.f32.mrf.mxu0
    %v666 = vadd.f32 %v270, %v665
    %v667 = vpop.f32.mrf.mxu0
    %v668 = vadd.f32 %v274, %v667
    %669 = vmatprep.mubr.f32.mxu0 0.0
    %670 = vmatmul.mubr.f32.gmra.mxu0 %v190
    %v671 = vpop.f32.mrf.mxu0
    %v672 = vadd.f32 %v270, %v671
    %v673 = vpop.f32.mrf.mxu0
    %v674 = vadd.f32 %v274, %v673
    %675 = vmatprep.mubr.f32.mxu0 0.0
    %676 = vmatmul.mubr.f32.gmra.mxu0 %v191
    %v677 = vpop.f32.mrf.mxu0
    %v678 = vadd.f32 %v270, %v677
    %v679 = vpop.f32.mrf.mxu0
    %v680 = vadd.f32 %v274, %v679
    %681 = vmatprep.mubr.f32.mxu0 0.0
    %682 = vmatmul.mubr.f32.gmra.mxu0 %v192
    %v683 = vpop.f32.mrf.mxu0
    %v684 = vadd.f32 %v270, %v683
    %v685 = vpop.f32.mrf.mxu0
    %v686 = vadd.f32 %v274, %v685
    %687 = vmatprep.mubr.f32.mxu0 0.0
    %688 = vmatmul.mubr.f32.gmra.mxu0 %v193
    %v689 = vpop.f32.mrf.mxu0
    %v690 = vadd.f32 %v270, %v689
    %v691 = vpop.f32.mrf.mxu0
    %v692 = vadd.f32 %v274, %v691
    %693 = vmatprep.mubr.f32.mxu0 0.0
    %694 = vmatmul.mubr.f32.gmra.mxu0 %v194
    %v695 = vpop.f32.mrf.mxu0
    %v696 = vadd.f32 %v270, %v695
    %v697 = vpop.f32.mrf.mxu0
    %v698 = vadd.f32 %v274, %v697
    %699 = vmatprep.mubr.f32.mxu0 0.0
    %700 = vmatmul.mubr.f32.gmra.mxu0 %v195
    %v701 = vpop.f32.mrf.mxu0
    %v702 = vadd.f32 %v270, %v701
    %v703 = vpop.f32.mrf.mxu0
    %v704 = vadd.f32 %v274, %v703
    %705 = vmatprep.mubr.f32.mxu0 0.0
    %706 = vmatmul.mubr.f32.gmra.mxu0 %v196
    %v707 = vpop.f32.mrf.mxu0
    %v708 = vadd.f32 %v270, %v707
    %v709 = vpop.f32.mrf.mxu0
    %v710 = vadd.f32 %v274, %v709
    %711 = vmatprep.mubr.f32.mxu0 0.0
    %712 = vmatmul.mubr.f32.gmra.mxu0 %v197
    %v713 = vpop.f32.mrf.mxu0
    %v714 = vadd.f32 %v270, %v713
    %v715 = vpop.f32.mrf.mxu0
    %v716 = vadd.f32 %v274, %v715
    %717 = vmatprep.mubr.f32.mxu0 0.0
    %718 = vmatmul.mubr.f32.gmra.mxu0 %v198
    %v719 = vpop.f32.mrf.mxu0
    %v720 = vadd.f32 %v270, %v719
    %v721 = vpop.f32.mrf.mxu0
    %v722 = vadd.f32 %v274, %v721
    %723 = vmatprep.mubr.f32.mxu0 0.0
    %724 = vmatmul.mubr.f32.gmra.mxu0 %v199
    %v725 = vpop.f32.mrf.mxu0
    %v726 = vadd.f32 %v270, %v725
    %v727 = vpop.f32.mrf.mxu0
    %v728 = vadd.f32 %v274, %v727
    %729 = vmatprep.mubr.f32.mxu0 0.0
    %730 = vmatmul.mubr.f32.gmra.mxu0 %v200
    %v731 = vpop.f32.mrf.mxu0
    %v732 = vadd.f32 %v270, %v731
    %v733 = vpop.f32.mrf.mxu0
    %v734 = vadd.f32 %v274, %v733
    %735 = vdwg.mxu0
    %736 = vmatprep.subr.mxu0 %v264
    %737 = vmatpush1.msra.mxu0 %v263
    %738 = vmatprep.subr.mxu0 %v260
    %739 = vmatpush1.msra.mxu0 %v259
    %740 = vmatprep.subr.mxu0 %v256
    %741 = vmatpush1.msra.mxu0 %v255
    %742 = vmatprep.subr.mxu0 %v252
    %743 = vmatpush1.msra.mxu0 %v251
    %744 = vmatprep.subr.mxu0 %v248
    %745 = vmatpush1.msra.mxu0 %v247
    %746 = vmatprep.subr.mxu0 %v244
    %747 = vmatpush1.msra.mxu0 %v243
    %748 = vmatprep.subr.mxu0 %v240
    %749 = vmatpush1.msra.mxu0 %v239
    %750 = vmatprep.subr.mxu0 %v236
    %751 = vmatpush1.msra.mxu0 %v235
    %752 = vmatprep.subr.mxu0 %v232
    %753 = vmatpush1.msra.mxu0 %v231
    %754 = vmatprep.subr.mxu0 %v228
    %755 = vmatpush1.msra.mxu0 %v227
    %756 = vmatprep.subr.mxu0 %v224
    %757 = vmatpush1.msra.mxu0 %v223
    %758 = vmatprep.subr.mxu0 %v220
    %759 = vmatpush1.msra.mxu0 %v219
    %760 = vmatprep.subr.mxu0 %v216
    %761 = vmatpush1.msra.mxu0 %v215
    %762 = vmatprep.subr.mxu0 %v212
    %763 = vmatpush1.msra.mxu0 %v211
    %764 = vmatprep.subr.mxu0 %v208
    %765 = vmatpush1.msra.mxu0 %v207
    %766 = vmatprep.subr.mxu0 %v204
    %767 = vmatpush1.msra.mxu0 %v203
    %768 = vmatprep.subr.mxu0 0.0
    %769 = vmatpush2.msra.mxu0 0.0
    %770 = vmatprep.subr.mxu0 0.0
    %771 = vmatpush2.msra.mxu0 0.0
    %772 = vmatprep.subr.mxu0 0.0
    %773 = vmatpush2.msra.mxu0 0.0
    %774 = vmatprep.subr.mxu0 0.0
    %775 = vmatpush2.msra.mxu0 0.0
    %776 = vmatprep.subr.mxu0 0.0
    %777 = vmatpush2.msra.mxu0 0.0
    %778 = vmatprep.subr.mxu0 0.0
    %779 = vmatpush2.msra.mxu0 0.0
    %780 = vmatprep.subr.mxu0 0.0
    %781 = vmatpush2.msra.mxu0 0.0
    %782 = vmatprep.subr.mxu0 0.0
    %783 = vmatpush2.msra.mxu0 0.0
    %784 = vmatprep.subr.mxu0 0.0
    %785 = vmatpush2.msra.mxu0 0.0
    %786 = vmatprep.subr.mxu0 0.0
    %787 = vmatpush2.msra.mxu0 0.0
    %788 = vmatprep.subr.mxu0 0.0
    %789 = vmatpush2.msra.mxu0 0.0
    %790 = vmatprep.subr.mxu0 0.0
    %791 = vmatpush2.msra.mxu0 0.0
    %792 = vmatprep.subr.mxu0 0.0
    %793 = vmatpush2.msra.mxu0 0.0
    %794 = vmatprep.subr.mxu0 0.0
    %795 = vmatpush2.msra.mxu0 0.0
    %796 = vmatprep.subr.mxu0 0.0
    %797 = vmatpush2.msra.mxu0 0.0
    %798 = vmatprep.subr.mxu0 0.0
    %799 = vmatpush2.msra.mxu0 0.0
    %800 = vmatprep.mubr.f32.mxu0 0.0
    %801 = vmatmul.mubr.f32.gmra.mxu0 %v137
    %v802 = vpop.f32.mrf.mxu0
    %v803 = vadd.f32 %v278, %v802
    %v804 = vpop.f32.mrf.mxu0
    %v805 = vadd.f32 %v282, %v804
    %806 = vmatprep.mubr.f32.mxu0 0.0
    %807 = vmatmul.mubr.f32.gmra.mxu0 %v138
    %v808 = vpop.f32.mrf.mxu0
    %v809 = vadd.f32 %v278, %v808
    %v810 = vpop.f32.mrf.mxu0
    %v811 = vadd.f32 %v282, %v810
    %812 = vmatprep.mubr.f32.mxu0 0.0
    %813 = vmatmul.mubr.f32.gmra.mxu0 %v139
    %v814 = vpop.f32.mrf.mxu0
    %v815 = vadd.f32 %v278, %v814
    %v816 = vpop.f32.mrf.mxu0
    %v817 = vadd.f32 %v282, %v816
    %818 = vmatprep.mubr.f32.mxu0 0.0
    %819 = vmatmul.mubr.f32.gmra.mxu0 %v140
    %v820 = vpop.f32.mrf.mxu0
    %v821 = vadd.f32 %v278, %v820
    %v822 = vpop.f32.mrf.mxu0
    %v823 = vadd.f32 %v282, %v822
    %824 = vmatprep.mubr.f32.mxu0 0.0
    %825 = vmatmul.mubr.f32.gmra.mxu0 %v141
    %v826 = vpop.f32.mrf.mxu0
    %v827 = vadd.f32 %v278, %v826
    %v828 = vpop.f32.mrf.mxu0
    %v829 = vadd.f32 %v282, %v828
    %830 = vmatprep.mubr.f32.mxu0 0.0
    %831 = vmatmul.mubr.f32.gmra.mxu0 %v142
    %v832 = vpop.f32.mrf.mxu0
    %v833 = vadd.f32 %v278, %v832
    %v834 = vpop.f32.mrf.mxu0
    %v835 = vadd.f32 %v282, %v834
    %836 = vmatprep.mubr.f32.mxu0 0.0
    %837 = vmatmul.mubr.f32.gmra.mxu0 %v143
    %v838 = vpop.f32.mrf.mxu0
    %v839 = vadd.f32 %v278, %v838
    %v840 = vpop.f32.mrf.mxu0
    %v841 = vadd.f32 %v282, %v840
    %842 = vmatprep.mubr.f32.mxu0 0.0
    %843 = vmatmul.mubr.f32.gmra.mxu0 %v144
    %v844 = vpop.f32.mrf.mxu0
    %v845 = vadd.f32 %v278, %v844
    %v846 = vpop.f32.mrf.mxu0
    %v847 = vadd.f32 %v282, %v846
    %848 = vmatprep.mubr.f32.mxu0 0.0
    %849 = vmatmul.mubr.f32.gmra.mxu0 %v145
    %v850 = vpop.f32.mrf.mxu0
    %v851 = vadd.f32 %v278, %v850
    %v852 = vpop.f32.mrf.mxu0
    %v853 = vadd.f32 %v282, %v852
    %854 = vmatprep.mubr.f32.mxu0 0.0
    %855 = vmatmul.mubr.f32.gmra.mxu0 %v146
    %v856 = vpop.f32.mrf.mxu0
    %v857 = vadd.f32 %v278, %v856
    %v858 = vpop.f32.mrf.mxu0
    %v859 = vadd.f32 %v282, %v858
    %860 = vmatprep.mubr.f32.mxu0 0.0
    %861 = vmatmul.mubr.f32.gmra.mxu0 %v147
    %v862 = vpop.f32.mrf.mxu0
    %v863 = vadd.f32 %v278, %v862
    %v864 = vpop.f32.mrf.mxu0
    %v865 = vadd.f32 %v282, %v864
    %866 = vmatprep.mubr.f32.mxu0 0.0
    %867 = vmatmul.mubr.f32.gmra.mxu0 %v148
    %v868 = vpop.f32.mrf.mxu0
    %v869 = vadd.f32 %v278, %v868
    %v870 = vpop.f32.mrf.mxu0
    %v871 = vadd.f32 %v282, %v870
    %872 = vmatprep.mubr.f32.mxu0 0.0
    %873 = vmatmul.mubr.f32.gmra.mxu0 %v149
    %v874 = vpop.f32.mrf.mxu0
    %v875 = vadd.f32 %v278, %v874
    %v876 = vpop.f32.mrf.mxu0
    %v877 = vadd.f32 %v282, %v876
    %878 = vmatprep.mubr.f32.mxu0 0.0
    %879 = vmatmul.mubr.f32.gmra.mxu0 %v150
    %v880 = vpop.f32.mrf.mxu0
    %v881 = vadd.f32 %v278, %v880
    %v882 = vpop.f32.mrf.mxu0
    %v883 = vadd.f32 %v282, %v882
    %884 = vmatprep.mubr.f32.mxu0 0.0
    %885 = vmatmul.mubr.f32.gmra.mxu0 %v151
    %v886 = vpop.f32.mrf.mxu0
    %v887 = vadd.f32 %v278, %v886
    %v888 = vpop.f32.mrf.mxu0
    %v889 = vadd.f32 %v282, %v888
    %890 = vmatprep.mubr.f32.mxu0 0.0
    %891 = vmatmul.mubr.f32.gmra.mxu0 %v152
    %v892 = vpop.f32.mrf.mxu0
    %v893 = vadd.f32 %v278, %v892
    %v894 = vpop.f32.mrf.mxu0
    %v895 = vadd.f32 %v282, %v894
    %896 = vmatprep.mubr.f32.mxu0 0.0
    %897 = vmatmul.mubr.f32.gmra.mxu0 %v153
    %v898 = vpop.f32.mrf.mxu0
    %v899 = vadd.f32 %v278, %v898
    %v900 = vpop.f32.mrf.mxu0
    %v901 = vadd.f32 %v282, %v900
    %902 = vmatprep.mubr.f32.mxu0 0.0
    %903 = vmatmul.mubr.f32.gmra.mxu0 %v154
    %v904 = vpop.f32.mrf.mxu0
    %v905 = vadd.f32 %v278, %v904
    %v906 = vpop.f32.mrf.mxu0
    %v907 = vadd.f32 %v282, %v906
    %908 = vmatprep.mubr.f32.mxu0 0.0
    %909 = vmatmul.mubr.f32.gmra.mxu0 %v155
    %v910 = vpop.f32.mrf.mxu0
    %v911 = vadd.f32 %v278, %v910
    %v912 = vpop.f32.mrf.mxu0
    %v913 = vadd.f32 %v282, %v912
    %914 = vmatprep.mubr.f32.mxu0 0.0
    %915 = vmatmul.mubr.f32.gmra.mxu0 %v156
    %v916 = vpop.f32.mrf.mxu0
    %v917 = vadd.f32 %v278, %v916
    %v918 = vpop.f32.mrf.mxu0
    %v919 = vadd.f32 %v282, %v918
    %920 = vmatprep.mubr.f32.mxu0 0.0
    %921 = vmatmul.mubr.f32.gmra.mxu0 %v157
    %v922 = vpop.f32.mrf.mxu0
    %v923 = vadd.f32 %v278, %v922
    %v924 = vpop.f32.mrf.mxu0
    %v925 = vadd.f32 %v282, %v924
    %926 = vmatprep.mubr.f32.mxu0 0.0
    %927 = vmatmul.mubr.f32.gmra.mxu0 %v158
    %v928 = vpop.f32.mrf.mxu0
    %v929 = vadd.f32 %v278, %v928
    %v930 = vpop.f32.mrf.mxu0
    %v931 = vadd.f32 %v282, %v930
    %932 = vmatprep.mubr.f32.mxu0 0.0
    %933 = vmatmul.mubr.f32.gmra.mxu0 %v159
    %v934 = vpop.f32.mrf.mxu0
    %v935 = vadd.f32 %v278, %v934
    %v936 = vpop.f32.mrf.mxu0
    %v937 = vadd.f32 %v282, %v936
    %938 = vmatprep.mubr.f32.mxu0 0.0
    %939 = vmatmul.mubr.f32.gmra.mxu0 %v160
    %v940 = vpop.f32.mrf.mxu0
    %v941 = vadd.f32 %v278, %v940
    %v942 = vpop.f32.mrf.mxu0
    %v943 = vadd.f32 %v282, %v942
    %944 = vmatprep.mubr.f32.mxu0 0.0
    %945 = vmatmul.mubr.f32.gmra.mxu0 %v161
    %v946 = vpop.f32.mrf.mxu0
    %v947 = vadd.f32 %v278, %v946
    %v948 = vpop.f32.mrf.mxu0
    %v949 = vadd.f32 %v282, %v948
    %950 = vmatprep.mubr.f32.mxu0 0.0
    %951 = vmatmul.mubr.f32.gmra.mxu0 %v162
    %v952 = vpop.f32.mrf.mxu0
    %v953 = vadd.f32 %v278, %v952
    %v954 = vpop.f32.mrf.mxu0
    %v955 = vadd.f32 %v282, %v954
    %956 = vmatprep.mubr.f32.mxu0 0.0
    %957 = vmatmul.mubr.f32.gmra.mxu0 %v163
    %v958 = vpop.f32.mrf.mxu0
    %v959 = vadd.f32 %v278, %v958
    %v960 = vpop.f32.mrf.mxu0
    %v961 = vadd.f32 %v282, %v960
    %962 = vmatprep.mubr.f32.mxu0 0.0
    %963 = vmatmul.mubr.f32.gmra.mxu0 %v164
    %v964 = vpop.f32.mrf.mxu0
    %v965 = vadd.f32 %v278, %v964
    %v966 = vpop.f32.mrf.mxu0
    %v967 = vadd.f32 %v282, %v966
    %968 = vmatprep.mubr.f32.mxu0 0.0
    %969 = vmatmul.mubr.f32.gmra.mxu0 %v165
    %v970 = vpop.f32.mrf.mxu0
    %v971 = vadd.f32 %v278, %v970
    %v972 = vpop.f32.mrf.mxu0
    %v973 = vadd.f32 %v282, %v972
    %974 = vmatprep.mubr.f32.mxu0 0.0
    %975 = vmatmul.mubr.f32.gmra.mxu0 %v166
    %v976 = vpop.f32.mrf.mxu0
    %v977 = vadd.f32 %v278, %v976
    %v978 = vpop.f32.mrf.mxu0
    %v979 = vadd.f32 %v282, %v978
    %980 = vmatprep.mubr.f32.mxu0 0.0
    %981 = vmatmul.mubr.f32.gmra.mxu0 %v167
    %v982 = vpop.f32.mrf.mxu0
    %v983 = vadd.f32 %v278, %v982
    %v984 = vpop.f32.mrf.mxu0
    %v985 = vadd.f32 %v282, %v984
    %986 = vmatprep.mubr.f32.mxu0 0.0
    %987 = vmatmul.mubr.f32.gmra.mxu0 %v168
    %v988 = vpop.f32.mrf.mxu0
    %v989 = vadd.f32 %v278, %v988
    %v990 = vpop.f32.mrf.mxu0
    %v991 = vadd.f32 %v282, %v990
    %992 = vmatprep.mubr.f32.mxu0 0.0
    %993 = vmatmul.mubr.f32.gmra.mxu0 %v169
    %v994 = vpop.f32.mrf.mxu0
    %v995 = vadd.f32 %v278, %v994
    %v996 = vpop.f32.mrf.mxu0
    %v997 = vadd.f32 %v282, %v996
    %998 = vmatprep.mubr.f32.mxu0 0.0
    %999 = vmatmul.mubr.f32.gmra.mxu0 %v170
    %v1000 = vpop.f32.mrf.mxu0
    %v1001 = vadd.f32 %v278, %v1000
    %v1002 = vpop.f32.mrf.mxu0
    %v1003 = vadd.f32 %v282, %v1002
    %1004 = vmatprep.mubr.f32.mxu0 0.0
    %1005 = vmatmul.mubr.f32.gmra.mxu0 %v171
    %v1006 = vpop.f32.mrf.mxu0
    %v1007 = vadd.f32 %v278, %v1006
    %v1008 = vpop.f32.mrf.mxu0
    %v1009 = vadd.f32 %v282, %v1008
    %1010 = vmatprep.mubr.f32.mxu0 0.0
    %1011 = vmatmul.mubr.f32.gmra.mxu0 %v172
    %v1012 = vpop.f32.mrf.mxu0
    %v1013 = vadd.f32 %v278, %v1012
    %v1014 = vpop.f32.mrf.mxu0
    %v1015 = vadd.f32 %v282, %v1014
    %1016 = vmatprep.mubr.f32.mxu0 0.0
    %1017 = vmatmul.mubr.f32.gmra.mxu0 %v173
    %v1018 = vpop.f32.mrf.mxu0
    %v1019 = vadd.f32 %v278, %v1018
    %v1020 = vpop.f32.mrf.mxu0
    %v1021 = vadd.f32 %v282, %v1020
    %1022 = vmatprep.mubr.f32.mxu0 0.0
    %1023 = vmatmul.mubr.f32.gmra.mxu0 %v174
    %v1024 = vpop.f32.mrf.mxu0
    %v1025 = vadd.f32 %v278, %v1024
    %v1026 = vpop.f32.mrf.mxu0
    %v1027 = vadd.f32 %v282, %v1026
    %1028 = vmatprep.mubr.f32.mxu0 0.0
    %1029 = vmatmul.mubr.f32.gmra.mxu0 %v175
    %v1030 = vpop.f32.mrf.mxu0
    %v1031 = vadd.f32 %v278, %v1030
    %v1032 = vpop.f32.mrf.mxu0
    %v1033 = vadd.f32 %v282, %v1032
    %1034 = vmatprep.mubr.f32.mxu0 0.0
    %1035 = vmatmul.mubr.f32.gmra.mxu0 %v176
    %v1036 = vpop.f32.mrf.mxu0
    %v1037 = vadd.f32 %v278, %v1036
    %v1038 = vpop.f32.mrf.mxu0
    %v1039 = vadd.f32 %v282, %v1038
    %1040 = vmatprep.mubr.f32.mxu0 0.0
    %1041 = vmatmul.mubr.f32.gmra.mxu0 %v177
    %v1042 = vpop.f32.mrf.mxu0
    %v1043 = vadd.f32 %v278, %v1042
    %v1044 = vpop.f32.mrf.mxu0
    %v1045 = vadd.f32 %v282, %v1044
    %1046 = vmatprep.mubr.f32.mxu0 0.0
    %1047 = vmatmul.mubr.f32.gmra.mxu0 %v178
    %v1048 = vpop.f32.mrf.mxu0
    %v1049 = vadd.f32 %v278, %v1048
    %v1050 = vpop.f32.mrf.mxu0
    %v1051 = vadd.f32 %v282, %v1050
    %1052 = vmatprep.mubr.f32.mxu0 0.0
    %1053 = vmatmul.mubr.f32.gmra.mxu0 %v179
    %v1054 = vpop.f32.mrf.mxu0
    %v1055 = vadd.f32 %v278, %v1054
    %v1056 = vpop.f32.mrf.mxu0
    %v1057 = vadd.f32 %v282, %v1056
    %1058 = vmatprep.mubr.f32.mxu0 0.0
    %1059 = vmatmul.mubr.f32.gmra.mxu0 %v180
    %v1060 = vpop.f32.mrf.mxu0
    %v1061 = vadd.f32 %v278, %v1060
    %v1062 = vpop.f32.mrf.mxu0
    %v1063 = vadd.f32 %v282, %v1062
    %1064 = vmatprep.mubr.f32.mxu0 0.0
    %1065 = vmatmul.mubr.f32.gmra.mxu0 %v181
    %v1066 = vpop.f32.mrf.mxu0
    %v1067 = vadd.f32 %v278, %v1066
    %v1068 = vpop.f32.mrf.mxu0
    %v1069 = vadd.f32 %v282, %v1068
    %1070 = vmatprep.mubr.f32.mxu0 0.0
    %1071 = vmatmul.mubr.f32.gmra.mxu0 %v182
    %v1072 = vpop.f32.mrf.mxu0
    %v1073 = vadd.f32 %v278, %v1072
    %v1074 = vpop.f32.mrf.mxu0
    %v1075 = vadd.f32 %v282, %v1074
    %1076 = vmatprep.mubr.f32.mxu0 0.0
    %1077 = vmatmul.mubr.f32.gmra.mxu0 %v183
    %v1078 = vpop.f32.mrf.mxu0
    %v1079 = vadd.f32 %v278, %v1078
    %v1080 = vpop.f32.mrf.mxu0
    %v1081 = vadd.f32 %v282, %v1080
    %1082 = vmatprep.mubr.f32.mxu0 0.0
    %1083 = vmatmul.mubr.f32.gmra.mxu0 %v184
    %v1084 = vpop.f32.mrf.mxu0
    %v1085 = vadd.f32 %v278, %v1084
    %v1086 = vpop.f32.mrf.mxu0
    %v1087 = vadd.f32 %v282, %v1086
    %1088 = vmatprep.mubr.f32.mxu0 0.0
    %1089 = vmatmul.mubr.f32.gmra.mxu0 %v185
    %v1090 = vpop.f32.mrf.mxu0
    %v1091 = vadd.f32 %v278, %v1090
    %v1092 = vpop.f32.mrf.mxu0
    %v1093 = vadd.f32 %v282, %v1092
    %1094 = vmatprep.mubr.f32.mxu0 0.0
    %1095 = vmatmul.mubr.f32.gmra.mxu0 %v186
    %v1096 = vpop.f32.mrf.mxu0
    %v1097 = vadd.f32 %v278, %v1096
    %v1098 = vpop.f32.mrf.mxu0
    %v1099 = vadd.f32 %v282, %v1098
    %1100 = vmatprep.mubr.f32.mxu0 0.0
    %1101 = vmatmul.mubr.f32.gmra.mxu0 %v187
    %v1102 = vpop.f32.mrf.mxu0
    %v1103 = vadd.f32 %v278, %v1102
    %v1104 = vpop.f32.mrf.mxu0
    %v1105 = vadd.f32 %v282, %v1104
    %1106 = vmatprep.mubr.f32.mxu0 0.0
    %1107 = vmatmul.mubr.f32.gmra.mxu0 %v188
    %v1108 = vpop.f32.mrf.mxu0
    %v1109 = vadd.f32 %v278, %v1108
    %v1110 = vpop.f32.mrf.mxu0
    %v1111 = vadd.f32 %v282, %v1110
    %1112 = vmatprep.mubr.f32.mxu0 0.0
    %1113 = vmatmul.mubr.f32.gmra.mxu0 %v189
    %v1114 = vpop.f32.mrf.mxu0
    %v1115 = vadd.f32 %v278, %v1114
    %v1116 = vpop.f32.mrf.mxu0
    %v1117 = vadd.f32 %v282, %v1116
    %1118 = vmatprep.mubr.f32.mxu0 0.0
    %1119 = vmatmul.mubr.f32.gmra.mxu0 %v190
    %v1120 = vpop.f32.mrf.mxu0
    %v1121 = vadd.f32 %v278, %v1120
    %v1122 = vpop.f32.mrf.mxu0
    %v1123 = vadd.f32 %v282, %v1122
    %1124 = vmatprep.mubr.f32.mxu0 0.0
    %1125 = vmatmul.mubr.f32.gmra.mxu0 %v191
    %v1126 = vpop.f32.mrf.mxu0
    %v1127 = vadd.f32 %v278, %v1126
    %v1128 = vpop.f32.mrf.mxu0
    %v1129 = vadd.f32 %v282, %v1128
    %1130 = vmatprep.mubr.f32.mxu0 0.0
    %1131 = vmatmul.mubr.f32.gmra.mxu0 %v192
    %v1132 = vpop.f32.mrf.mxu0
    %v1133 = vadd.f32 %v278, %v1132
    %v1134 = vpop.f32.mrf.mxu0
    %v1135 = vadd.f32 %v282, %v1134
    %1136 = vmatprep.mubr.f32.mxu0 0.0
    %1137 = vmatmul.mubr.f32.gmra.mxu0 %v193
    %v1138 = vpop.f32.mrf.mxu0
    %v1139 = vadd.f32 %v278, %v1138
    %v1140 = vpop.f32.mrf.mxu0
    %v1141 = vadd.f32 %v282, %v1140
    %1142 = vmatprep.mubr.f32.mxu0 0.0
    %1143 = vmatmul.mubr.f32.gmra.mxu0 %v194
    %v1144 = vpop.f32.mrf.mxu0
    %v1145 = vadd.f32 %v278, %v1144
    %v1146 = vpop.f32.mrf.mxu0
    %v1147 = vadd.f32 %v282, %v1146
    %1148 = vmatprep.mubr.f32.mxu0 0.0
    %1149 = vmatmul.mubr.f32.gmra.mxu0 %v195
    %v1150 = vpop.f32.mrf.mxu0
    %v1151 = vadd.f32 %v278, %v1150
    %v1152 = vpop.f32.mrf.mxu0
    %v1153 = vadd.f32 %v282, %v1152
    %1154 = vmatprep.mubr.f32.mxu0 0.0
    %1155 = vmatmul.mubr.f32.gmra.mxu0 %v196
    %v1156 = vpop.f32.mrf.mxu0
    %v1157 = vadd.f32 %v278, %v1156
    %v1158 = vpop.f32.mrf.mxu0
    %v1159 = vadd.f32 %v282, %v1158
    %1160 = vmatprep.mubr.f32.mxu0 0.0
    %1161 = vmatmul.mubr.f32.gmra.mxu0 %v197
    %v1162 = vpop.f32.mrf.mxu0
    %v1163 = vadd.f32 %v278, %v1162
    %v1164 = vpop.f32.mrf.mxu0
    %v1165 = vadd.f32 %v282, %v1164
    %1166 = vmatprep.mubr.f32.mxu0 0.0
    %1167 = vmatmul.mubr.f32.gmra.mxu0 %v198
    %v1168 = vpop.f32.mrf.mxu0
    %v1169 = vadd.f32 %v278, %v1168
    %v1170 = vpop.f32.mrf.mxu0
    %v1171 = vadd.f32 %v282, %v1170
    %1172 = vmatprep.mubr.f32.mxu0 0.0
    %1173 = vmatmul.mubr.f32.gmra.mxu0 %v199
    %v1174 = vpop.f32.mrf.mxu0
    %v1175 = vadd.f32 %v278, %v1174
    %v1176 = vpop.f32.mrf.mxu0
    %v1177 = vadd.f32 %v282, %v1176
    %1178 = vmatprep.mubr.f32.mxu0 0.0
    %1179 = vmatmul.mubr.f32.gmra.mxu0 %v200
    %v1180 = vpop.f32.mrf.mxu0
    %v1181 = vadd.f32 %v278, %v1180
    %v1182 = vpop.f32.mrf.mxu0
    %v1183 = vadd.f32 %v282, %v1182
    %1184 = vdwg.mxu0
    %v1185 = vmax.f32 %v354, 0.0
    %v1186 = vmax.f32 %v356, 0.0
    %v1187 = vmax.f32 %v803, 0.0
    %v1188 = vmax.f32 %v805, 0.0
    %v1189 = vmax.f32 %v360, 0.0
    %v1190 = vmax.f32 %v362, 0.0
    %v1191 = vmax.f32 %v809, 0.0
    %v1192 = vmax.f32 %v811, 0.0
    %v1193 = vmax.f32 %v366, 0.0
    %v1194 = vmax.f32 %v368, 0.0
    %v1195 = vmax.f32 %v815, 0.0
    %v1196 = vmax.f32 %v817, 0.0
    %v1197 = vmax.f32 %v372, 0.0
    %v1198 = vmax.f32 %v374, 0.0
    %v1199 = vmax.f32 %v821, 0.0
    %v1200 = vmax.f32 %v823, 0.0
    %v1201 = vmax.f32 %v378, 0.0
    %v1202 = vmax.f32 %v380, 0.0
    %v1203 = vmax.f32 %v827, 0.0
    %v1204 = vmax.f32 %v829, 0.0
    %v1205 = vmax.f32 %v384, 0.0
    %v1206 = vmax.f32 %v386, 0.0
    %v1207 = vmax.f32 %v833, 0.0
    %v1208 = vmax.f32 %v835, 0.0
    %v1209 = vmax.f32 %v390, 0.0
    %v1210 = vmax.f32 %v392, 0.0
    %v1211 = vmax.f32 %v839, 0.0
    %v1212 = vmax.f32 %v841, 0.0
    %v1213 = vmax.f32 %v396, 0.0
    %v1214 = vmax.f32 %v398, 0.0
    %v1215 = vmax.f32 %v845, 0.0
    %v1216 = vmax.f32 %v847, 0.0
    %v1217 = vmax.f32 %v402, 0.0
    %v1218 = vmax.f32 %v404, 0.0
    %v1219 = vmax.f32 %v851, 0.0
    %v1220 = vmax.f32 %v853, 0.0
    %v1221 = vmax.f32 %v408, 0.0
    %v1222 = vmax.f32 %v410, 0.0
    %v1223 = vmax.f32 %v857, 0.0
    %v1224 = vmax.f32 %v859, 0.0
    %v1225 = vmax.f32 %v414, 0.0
    %v1226 = vmax.f32 %v416, 0.0
    %v1227 = vmax.f32 %v863, 0.0
    %v1228 = vmax.f32 %v865, 0.0
    %v1229 = vmax.f32 %v420, 0.0
    %v1230 = vmax.f32 %v422, 0.0
    %v1231 = vmax.f32 %v869, 0.0
    %v1232 = vmax.f32 %v871, 0.0
    %v1233 = vmax.f32 %v426, 0.0
    %v1234 = vmax.f32 %v428, 0.0
    %v1235 = vmax.f32 %v875, 0.0
    %v1236 = vmax.f32 %v877, 0.0
    %v1237 = vmax.f32 %v432, 0.0
    %v1238 = vmax.f32 %v434, 0.0
    %v1239 = vmax.f32 %v881, 0.0
    %v1240 = vmax.f32 %v883, 0.0
    %v1241 = vmax.f32 %v438, 0.0
    %v1242 = vmax.f32 %v440, 0.0
    %v1243 = vmax.f32 %v887, 0.0
    %v1244 = vmax.f32 %v889, 0.0
    %v1245 = vmax.f32 %v444, 0.0
    %v1246 = vmax.f32 %v446, 0.0
    %v1247 = vmax.f32 %v893, 0.0
    %v1248 = vmax.f32 %v895, 0.0
    %v1249 = vmax.f32 %v450, 0.0
    %v1250 = vmax.f32 %v452, 0.0
    %v1251 = vmax.f32 %v899, 0.0
    %v1252 = vmax.f32 %v901, 0.0
    %v1253 = vmax.f32 %v456, 0.0
    %v1254 = vmax.f32 %v458, 0.0
    %v1255 = vmax.f32 %v905, 0.0
    %v1256 = vmax.f32 %v907, 0.0
    %v1257 = vmax.f32 %v462, 0.0
    %v1258 = vmax.f32 %v464, 0.0
    %v1259 = vmax.f32 %v911, 0.0
    %v1260 = vmax.f32 %v913, 0.0
    %v1261 = vmax.f32 %v468, 0.0
    %v1262 = vmax.f32 %v470, 0.0
    %v1263 = vmax.f32 %v917, 0.0
    %v1264 = vmax.f32 %v919, 0.0
    %v1265 = vmax.f32 %v474, 0.0
    %v1266 = vmax.f32 %v476, 0.0
    %v1267 = vmax.f32 %v923, 0.0
    %v1268 = vmax.f32 %v925, 0.0
    %v1269 = vmax.f32 %v480, 0.0
    %v1270 = vmax.f32 %v482, 0.0
    %v1271 = vmax.f32 %v929, 0.0
    %v1272 = vmax.f32 %v931, 0.0
    %v1273 = vmax.f32 %v486, 0.0
    %v1274 = vmax.f32 %v488, 0.0
    %v1275 = vmax.f32 %v935, 0.0
    %v1276 = vmax.f32 %v937, 0.0
    %v1277 = vmax.f32 %v492, 0.0
    %v1278 = vmax.f32 %v494, 0.0
    %v1279 = vmax.f32 %v941, 0.0
    %v1280 = vmax.f32 %v943, 0.0
    %v1281 = vmax.f32 %v498, 0.0
    %v1282 = vmax.f32 %v500, 0.0
    %v1283 = vmax.f32 %v947, 0.0
    %v1284 = vmax.f32 %v949, 0.0
    %v1285 = vmax.f32 %v504, 0.0
    %v1286 = vmax.f32 %v506, 0.0
    %v1287 = vmax.f32 %v953, 0.0
    %v1288 = vmax.f32 %v955, 0.0
    %v1289 = vmax.f32 %v510, 0.0
    %v1290 = vmax.f32 %v512, 0.0
    %v1291 = vmax.f32 %v959, 0.0
    %v1292 = vmax.f32 %v961, 0.0
    %v1293 = vmax.f32 %v516, 0.0
    %v1294 = vmax.f32 %v518, 0.0
    %v1295 = vmax.f32 %v965, 0.0
    %v1296 = vmax.f32 %v967, 0.0
    %v1297 = vmax.f32 %v522, 0.0
    %v1298 = vmax.f32 %v524, 0.0
    %v1299 = vmax.f32 %v971, 0.0
    %v1300 = vmax.f32 %v973, 0.0
    %v1301 = vmax.f32 %v528, 0.0
    %v1302 = vmax.f32 %v530, 0.0
    %v1303 = vmax.f32 %v977, 0.0
    %v1304 = vmax.f32 %v979, 0.0
    %v1305 = vmax.f32 %v534, 0.0
    %v1306 = vmax.f32 %v536, 0.0
    %v1307 = vmax.f32 %v983, 0.0
    %v1308 = vmax.f32 %v985, 0.0
    %v1309 = vmax.f32 %v540, 0.0
    %v1310 = vmax.f32 %v542, 0.0
    %v1311 = vmax.f32 %v989, 0.0
    %v1312 = vmax.f32 %v991, 0.0
    %v1313 = vmax.f32 %v546, 0.0
    %v1314 = vmax.f32 %v548, 0.0
    %v1315 = vmax.f32 %v995, 0.0
    %v1316 = vmax.f32 %v997, 0.0
    %v1317 = vmax.f32 %v552, 0.0
    %v1318 = vmax.f32 %v554, 0.0
    %v1319 = vmax.f32 %v1001, 0.0
    %v1320 = vmax.f32 %v1003, 0.0
    %v1321 = vmax.f32 %v558, 0.0
    %v1322 = vmax.f32 %v560, 0.0
    %v1323 = vmax.f32 %v1007, 0.0
    %v1324 = vmax.f32 %v1009, 0.0
    %v1325 = vmax.f32 %v564, 0.0
    %v1326 = vmax.f32 %v566, 0.0
    %v1327 = vmax.f32 %v1013, 0.0
    %v1328 = vmax.f32 %v1015, 0.0
    %v1329 = vmax.f32 %v570, 0.0
    %v1330 = vmax.f32 %v572, 0.0
    %v1331 = vmax.f32 %v1019, 0.0
    %v1332 = vmax.f32 %v1021, 0.0
    %v1333 = vmax.f32 %v576, 0.0
    %v1334 = vmax.f32 %v578, 0.0
    %v1335 = vmax.f32 %v1025, 0.0
    %v1336 = vmax.f32 %v1027, 0.0
    %v1337 = vmax.f32 %v582, 0.0
    %v1338 = vmax.f32 %v584, 0.0
    %v1339 = vmax.f32 %v1031, 0.0
    %v1340 = vmax.f32 %v1033, 0.0
    %v1341 = vmax.f32 %v588, 0.0
    %v1342 = vmax.f32 %v590, 0.0
    %v1343 = vmax.f32 %v1037, 0.0
    %v1344 = vmax.f32 %v1039, 0.0
    %v1345 = vmax.f32 %v594, 0.0
    %v1346 = vmax.f32 %v596, 0.0
    %v1347 = vmax.f32 %v1043, 0.0
    %v1348 = vmax.f32 %v1045, 0.0
    %v1349 = vmax.f32 %v600, 0.0
    %v1350 = vmax.f32 %v602, 0.0
    %v1351 = vmax.f32 %v1049, 0.0
    %v1352 = vmax.f32 %v1051, 0.0
    %v1353 = vmax.f32 %v606, 0.0
    %v1354 = vmax.f32 %v608, 0.0
    %v1355 = vmax.f32 %v1055, 0.0
    %v1356 = vmax.f32 %v1057, 0.0
    %v1357 = vmax.f32 %v612, 0.0
    %v1358 = vmax.f32 %v614, 0.0
    %v1359 = vmax.f32 %v1061, 0.0
    %v1360 = vmax.f32 %v1063, 0.0
    %v1361 = vmax.f32 %v618, 0.0
    %v1362 = vmax.f32 %v620, 0.0
    %v1363 = vmax.f32 %v1067, 0.0
    %v1364 = vmax.f32 %v1069, 0.0
    %v1365 = vmax.f32 %v624, 0.0
    %v1366 = vmax.f32 %v626, 0.0
    %v1367 = vmax.f32 %v1073, 0.0
    %v1368 = vmax.f32 %v1075, 0.0
    %v1369 = vmax.f32 %v630, 0.0
    %v1370 = vmax.f32 %v632, 0.0
    %v1371 = vmax.f32 %v1079, 0.0
    %v1372 = vmax.f32 %v1081, 0.0
    %v1373 = vmax.f32 %v636, 0.0
    %v1374 = vmax.f32 %v638, 0.0
    %v1375 = vmax.f32 %v1085, 0.0
    %v1376 = vmax.f32 %v1087, 0.0
    %v1377 = vmax.f32 %v642, 0.0
    %v1378 = vmax.f32 %v644, 0.0
    %v1379 = vmax.f32 %v1091, 0.0
    %v1380 = vmax.f32 %v1093, 0.0
    %v1381 = vmax.f32 %v648, 0.0
    %v1382 = vmax.f32 %v650, 0.0
    %v1383 = vmax.f32 %v1097, 0.0
    %v1384 = vmax.f32 %v1099, 0.0
    %v1385 = vmax.f32 %v654, 0.0
    %v1386 = vmax.f32 %v656, 0.0
    %v1387 = vmax.f32 %v1103, 0.0
    %v1388 = vmax.f32 %v1105, 0.0
    %v1389 = vmax.f32 %v660, 0.0
    %v1390 = vmax.f32 %v662, 0.0
    %v1391 = vmax.f32 %v1109, 0.0
    %v1392 = vmax.f32 %v1111, 0.0
    %v1393 = vmax.f32 %v666, 0.0
    %v1394 = vmax.f32 %v668, 0.0
    %v1395 = vmax.f32 %v1115, 0.0
    %v1396 = vmax.f32 %v1117, 0.0
    %v1397 = vmax.f32 %v672, 0.0
    %v1398 = vmax.f32 %v674, 0.0
    %v1399 = vmax.f32 %v1121, 0.0
    %v1400 = vmax.f32 %v1123, 0.0
    %v1401 = vmax.f32 %v678, 0.0
    %v1402 = vmax.f32 %v680, 0.0
    %v1403 = vmax.f32 %v1127, 0.0
    %v1404 = vmax.f32 %v1129, 0.0
    %v1405 = vmax.f32 %v684, 0.0
    %v1406 = vmax.f32 %v686, 0.0
    %v1407 = vmax.f32 %v1133, 0.0
    %v1408 = vmax.f32 %v1135, 0.0
    %v1409 = vmax.f32 %v690, 0.0
    %v1410 = vmax.f32 %v692, 0.0
    %v1411 = vmax.f32 %v1139, 0.0
    %v1412 = vmax.f32 %v1141, 0.0
    %v1413 = vmax.f32 %v696, 0.0
    %v1414 = vmax.f32 %v698, 0.0
    %v1415 = vmax.f32 %v1145, 0.0
    %v1416 = vmax.f32 %v1147, 0.0
    %v1417 = vmax.f32 %v702, 0.0
    %v1418 = vmax.f32 %v704, 0.0
    %v1419 = vmax.f32 %v1151, 0.0
    %v1420 = vmax.f32 %v1153, 0.0
    %v1421 = vmax.f32 %v708, 0.0
    %v1422 = vmax.f32 %v710, 0.0
    %v1423 = vmax.f32 %v1157, 0.0
    %v1424 = vmax.f32 %v1159, 0.0
    %v1425 = vmax.f32 %v714, 0.0
    %v1426 = vmax.f32 %v716, 0.0
    %v1427 = vmax.f32 %v1163, 0.0
    %v1428 = vmax.f32 %v1165, 0.0
    %v1429 = vmax.f32 %v720, 0.0
    %v1430 = vmax.f32 %v722, 0.0
    %v1431 = vmax.f32 %v1169, 0.0
    %v1432 = vmax.f32 %v1171, 0.0
    %v1433 = vmax.f32 %v726, 0.0
    %v1434 = vmax.f32 %v728, 0.0
    %v1435 = vmax.f32 %v1175, 0.0
    %v1436 = vmax.f32 %v1177, 0.0
    %v1437 = vmax.f32 %v732, 0.0
    %v1438 = vmax.f32 %v734, 0.0
    %v1439 = vmax.f32 %v1181, 0.0
    %v1440 = vmax.f32 %v1183, 0.0
    %v1441 = vld [vmem:[#allocation8] sm:$0xff]
    %v1442 = vld [vmem:[#allocation8 + $0x8] sm:$0xff]
    %v1443 = vld [vmem:[#allocation8 + $0x10] sm:$0xff]
    %v1444 = vld [vmem:[#allocation8 + $0x18] sm:$0xff]
    %v1445 = vld [vmem:[#allocation8 + $0x20] sm:$0xff]
    %v1446 = vld [vmem:[#allocation8 + $0x28] sm:$0xff]
    %v1447 = vld [vmem:[#allocation8 + $0x30] sm:$0xff]
    %v1448 = vld [vmem:[#allocation8 + $0x38] sm:$0xff]
    %v1449 = vld [vmem:[#allocation8 + $0x40] sm:$0xff]
    %v1450 = vld [vmem:[#allocation8 + $0x48] sm:$0xff]
    %v1451 = vld [vmem:[#allocation8 + $0x50] sm:$0xff]
    %v1452 = vld [vmem:[#allocation8 + $0x58] sm:$0xff]
    %v1453 = vld [vmem:[#allocation8 + $0x60] sm:$0xff]
    %v1454 = vld [vmem:[#allocation8 + $0x68] sm:$0xff]
    %v1455 = vld [vmem:[#allocation8 + $0x70] sm:$0xff]
    %v1456 = vld [vmem:[#allocation8 + $0x78] sm:$0xff]
    %v1457 = vld [vmem:[#allocation8 + $0x80] sm:$0xff]
    %v1458 = vld [vmem:[#allocation8 + $0x88] sm:$0xff]
    %v1459 = vld [vmem:[#allocation8 + $0x90] sm:$0xff]
    %v1460 = vld [vmem:[#allocation8 + $0x98] sm:$0xff]
    %v1461 = vld [vmem:[#allocation8 + $0xa0] sm:$0xff]
    %v1462 = vld [vmem:[#allocation8 + $0xa8] sm:$0xff]
    %v1463 = vld [vmem:[#allocation8 + $0xb0] sm:$0xff]
    %v1464 = vld [vmem:[#allocation8 + $0xb8] sm:$0xff]
    %v1465 = vld [vmem:[#allocation8 + $0xc0] sm:$0xff]
    %v1466 = vld [vmem:[#allocation8 + $0xc8] sm:$0xff]
    %v1467 = vld [vmem:[#allocation8 + $0xd0] sm:$0xff]
    %v1468 = vld [vmem:[#allocation8 + $0xd8] sm:$0xff]
    %v1469 = vld [vmem:[#allocation8 + $0xe0] sm:$0xff]
    %v1470 = vld [vmem:[#allocation8 + $0xe8] sm:$0xff]
    %v1471 = vld [vmem:[#allocation8 + $0xf0] sm:$0xff]
    %v1472 = vld [vmem:[#allocation8 + $0xf8] sm:$0xff]
    %v1473 = vld [vmem:[#allocation8 + $0x100] sm:$0xff]
    %v1474 = vld [vmem:[#allocation8 + $0x108] sm:$0xff]
    %v1475 = vld [vmem:[#allocation8 + $0x110] sm:$0xff]
    %v1476 = vld [vmem:[#allocation8 + $0x118] sm:$0xff]
    %v1477 = vld [vmem:[#allocation8 + $0x120] sm:$0xff]
    %v1478 = vld [vmem:[#allocation8 + $0x128] sm:$0xff]
    %v1479 = vld [vmem:[#allocation8 + $0x130] sm:$0xff]
    %v1480 = vld [vmem:[#allocation8 + $0x138] sm:$0xff]
    %v1481 = vld [vmem:[#allocation8 + $0x140] sm:$0xff]
    %v1482 = vld [vmem:[#allocation8 + $0x148] sm:$0xff]
    %v1483 = vld [vmem:[#allocation8 + $0x150] sm:$0xff]
    %v1484 = vld [vmem:[#allocation8 + $0x158] sm:$0xff]
    %v1485 = vld [vmem:[#allocation8 + $0x160] sm:$0xff]
    %v1486 = vld [vmem:[#allocation8 + $0x168] sm:$0xff]
    %v1487 = vld [vmem:[#allocation8 + $0x170] sm:$0xff]
    %v1488 = vld [vmem:[#allocation8 + $0x178] sm:$0xff]
    %v1489 = vld [vmem:[#allocation8 + $0x180] sm:$0xff]
    %v1490 = vld [vmem:[#allocation8 + $0x188] sm:$0xff]
    %v1491 = vld [vmem:[#allocation8 + $0x190] sm:$0xff]
    %v1492 = vld [vmem:[#allocation8 + $0x198] sm:$0xff]
    %v1493 = vld [vmem:[#allocation8 + $0x1a0] sm:$0xff]
    %v1494 = vld [vmem:[#allocation8 + $0x1a8] sm:$0xff]
    %v1495 = vld [vmem:[#allocation8 + $0x1b0] sm:$0xff]
    %v1496 = vld [vmem:[#allocation8 + $0x1b8] sm:$0xff]
    %v1497 = vld [vmem:[#allocation8 + $0x1c0] sm:$0xff]
    %v1498 = vld [vmem:[#allocation8 + $0x1c8] sm:$0xff]
    %v1499 = vld [vmem:[#allocation8 + $0x1d0] sm:$0xff]
    %v1500 = vld [vmem:[#allocation8 + $0x1d8] sm:$0xff]
    %v1501 = vld [vmem:[#allocation8 + $0x1e0] sm:$0xff]
    %v1502 = vld [vmem:[#allocation8 + $0x1e8] sm:$0xff]
    %v1503 = vld [vmem:[#allocation8 + $0x1f0] sm:$0xff]
    %v1504 = vld [vmem:[#allocation8 + $0x1f8] sm:$0xff]
    %v1505 = vld [vmem:[#allocation7] sm:$0xff]
    %v1506 = vld [vmem:[#allocation7 + $0x8] sm:$0xff]
    %v1507 = vld [vmem:[#allocation7 + $0x10] sm:$0xff]
    %v1508 = vld [vmem:[#allocation7 + $0x18] sm:$0xff]
    %v1509 = vld [vmem:[#allocation7 + $0x20] sm:$0xff]
    %v1510 = vld [vmem:[#allocation7 + $0x28] sm:$0xff]
    %v1511 = vld [vmem:[#allocation7 + $0x30] sm:$0xff]
    %v1512 = vld [vmem:[#allocation7 + $0x38] sm:$0xff]
    %v1513 = vld [vmem:[#allocation7 + $0x40] sm:$0xff]
    %v1514 = vld [vmem:[#allocation7 + $0x48] sm:$0xff]
    %v1515 = vld [vmem:[#allocation7 + $0x50] sm:$0xff]
    %v1516 = vld [vmem:[#allocation7 + $0x58] sm:$0xff]
    %v1517 = vld [vmem:[#allocation7 + $0x60] sm:$0xff]
    %v1518 = vld [vmem:[#allocation7 + $0x68] sm:$0xff]
    %v1519 = vld [vmem:[#allocation7 + $0x70] sm:$0xff]
    %v1520 = vld [vmem:[#allocation7 + $0x78] sm:$0xff]
    %v1521 = vld [vmem:[#allocation7 + $0x80] sm:$0xff]
    %v1522 = vld [vmem:[#allocation7 + $0x88] sm:$0xff]
    %v1523 = vld [vmem:[#allocation7 + $0x90] sm:$0xff]
    %v1524 = vld [vmem:[#allocation7 + $0x98] sm:$0xff]
    %v1525 = vld [vmem:[#allocation7 + $0xa0] sm:$0xff]
    %v1526 = vld [vmem:[#allocation7 + $0xa8] sm:$0xff]
    %v1527 = vld [vmem:[#allocation7 + $0xb0] sm:$0xff]
    %v1528 = vld [vmem:[#allocation7 + $0xb8] sm:$0xff]
    %v1529 = vld [vmem:[#allocation7 + $0xc0] sm:$0xff]
    %v1530 = vld [vmem:[#allocation7 + $0xc8] sm:$0xff]
    %v1531 = vld [vmem:[#allocation7 + $0xd0] sm:$0xff]
    %v1532 = vld [vmem:[#allocation7 + $0xd8] sm:$0xff]
    %v1533 = vld [vmem:[#allocation7 + $0xe0] sm:$0xff]
    %v1534 = vld [vmem:[#allocation7 + $0xe8] sm:$0xff]
    %v1535 = vld [vmem:[#allocation7 + $0xf0] sm:$0xff]
    %v1536 = vld [vmem:[#allocation7 + $0xf8] sm:$0xff]
    %v1537 = vld [vmem:[#allocation7 + $0x100] sm:$0xff]
    %v1538 = vld [vmem:[#allocation7 + $0x108] sm:$0xff]
    %v1539 = vld [vmem:[#allocation7 + $0x110] sm:$0xff]
    %v1540 = vld [vmem:[#allocation7 + $0x118] sm:$0xff]
    %v1541 = vld [vmem:[#allocation7 + $0x120] sm:$0xff]
    %v1542 = vld [vmem:[#allocation7 + $0x128] sm:$0xff]
    %v1543 = vld [vmem:[#allocation7 + $0x130] sm:$0xff]
    %v1544 = vld [vmem:[#allocation7 + $0x138] sm:$0xff]
    %v1545 = vld [vmem:[#allocation7 + $0x140] sm:$0xff]
    %v1546 = vld [vmem:[#allocation7 + $0x148] sm:$0xff]
    %v1547 = vld [vmem:[#allocation7 + $0x150] sm:$0xff]
    %v1548 = vld [vmem:[#allocation7 + $0x158] sm:$0xff]
    %v1549 = vld [vmem:[#allocation7 + $0x160] sm:$0xff]
    %v1550 = vld [vmem:[#allocation7 + $0x168] sm:$0xff]
    %v1551 = vld [vmem:[#allocation7 + $0x170] sm:$0xff]
    %v1552 = vld [vmem:[#allocation7 + $0x178] sm:$0xff]
    %v1553 = vld [vmem:[#allocation7 + $0x180] sm:$0xff]
    %v1554 = vld [vmem:[#allocation7 + $0x188] sm:$0xff]
    %v1555 = vld [vmem:[#allocation7 + $0x190] sm:$0xff]
    %v1556 = vld [vmem:[#allocation7 + $0x198] sm:$0xff]
    %v1557 = vld [vmem:[#allocation7 + $0x1a0] sm:$0xff]
    %v1558 = vld [vmem:[#allocation7 + $0x1a8] sm:$0xff]
    %v1559 = vld [vmem:[#allocation7 + $0x1b0] sm:$0xff]
    %v1560 = vld [vmem:[#allocation7 + $0x1b8] sm:$0xff]
    %v1561 = vld [vmem:[#allocation7 + $0x1c0] sm:$0xff]
    %v1562 = vld [vmem:[#allocation7 + $0x1c8] sm:$0xff]
    %v1563 = vld [vmem:[#allocation7 + $0x1d0] sm:$0xff]
    %v1564 = vld [vmem:[#allocation7 + $0x1d8] sm:$0xff]
    %v1565 = vld [vmem:[#allocation7 + $0x1e0] sm:$0xff]
    %v1566 = vld [vmem:[#allocation7 + $0x1e8] sm:$0xff]
    %v1567 = vld [vmem:[#allocation7 + $0x1f0] sm:$0xff]
    %v1568 = vld [vmem:[#allocation7 + $0x1f8] sm:$0xff]
    %1569 = vmatprep.subr.mxu0 0.0
    %1570 = vmatpush1.msra.mxu0 %v1520
    %1571 = vmatprep.subr.mxu0 0.0
    %1572 = vmatpush1.msra.mxu0 %v1519
    %1573 = vmatprep.subr.mxu0 0.0
    %1574 = vmatpush1.msra.mxu0 %v1518
    %1575 = vmatprep.subr.mxu0 0.0
    %1576 = vmatpush1.msra.mxu0 %v1517
    %1577 = vmatprep.subr.mxu0 0.0
    %1578 = vmatpush1.msra.mxu0 %v1516
    %1579 = vmatprep.subr.mxu0 0.0
    %1580 = vmatpush1.msra.mxu0 %v1515
    %1581 = vmatprep.subr.mxu0 0.0
    %1582 = vmatpush1.msra.mxu0 %v1514
    %1583 = vmatprep.subr.mxu0 0.0
    %1584 = vmatpush1.msra.mxu0 %v1513
    %1585 = vmatprep.subr.mxu0 0.0
    %1586 = vmatpush1.msra.mxu0 %v1512
    %1587 = vmatprep.subr.mxu0 0.0
    %1588 = vmatpush1.msra.mxu0 %v1511
    %1589 = vmatprep.subr.mxu0 0.0
    %1590 = vmatpush1.msra.mxu0 %v1510
    %1591 = vmatprep.subr.mxu0 0.0
    %1592 = vmatpush1.msra.mxu0 %v1509
    %1593 = vmatprep.subr.mxu0 0.0
    %1594 = vmatpush1.msra.mxu0 %v1508
    %1595 = vmatprep.subr.mxu0 0.0
    %1596 = vmatpush1.msra.mxu0 %v1507
    %1597 = vmatprep.subr.mxu0 0.0
    %1598 = vmatpush1.msra.mxu0 %v1506
    %1599 = vmatprep.subr.mxu0 0.0
    %1600 = vmatpush1.msra.mxu0 %v1505
    %1601 = vmatprep.subr.mxu0 0.0
    %1602 = vmatpush2.msra.mxu0 %v1536
    %1603 = vmatprep.subr.mxu0 0.0
    %1604 = vmatpush2.msra.mxu0 %v1535
    %1605 = vmatprep.subr.mxu0 0.0
    %1606 = vmatpush2.msra.mxu0 %v1534
    %1607 = vmatprep.subr.mxu0 0.0
    %1608 = vmatpush2.msra.mxu0 %v1533
    %1609 = vmatprep.subr.mxu0 0.0
    %1610 = vmatpush2.msra.mxu0 %v1532
    %1611 = vmatprep.subr.mxu0 0.0
    %1612 = vmatpush2.msra.mxu0 %v1531
    %1613 = vmatprep.subr.mxu0 0.0
    %1614 = vmatpush2.msra.mxu0 %v1530
    %1615 = vmatprep.subr.mxu0 0.0
    %1616 = vmatpush2.msra.mxu0 %v1529
    %1617 = vmatprep.subr.mxu0 0.0
    %1618 = vmatpush2.msra.mxu0 %v1528
    %1619 = vmatprep.subr.mxu0 0.0
    %1620 = vmatpush2.msra.mxu0 %v1527
    %1621 = vmatprep.subr.mxu0 0.0
    %1622 = vmatpush2.msra.mxu0 %v1526
    %1623 = vmatprep.subr.mxu0 0.0
    %1624 = vmatpush2.msra.mxu0 %v1525
    %1625 = vmatprep.subr.mxu0 0.0
    %1626 = vmatpush2.msra.mxu0 %v1524
    %1627 = vmatprep.subr.mxu0 0.0
    %1628 = vmatpush2.msra.mxu0 %v1523
    %1629 = vmatprep.subr.mxu0 0.0
    %1630 = vmatpush2.msra.mxu0 %v1522
    %1631 = vmatprep.subr.mxu0 0.0
    %1632 = vmatpush2.msra.mxu0 %v1521
    %1633 = vmatprep.mubr.f32.mxu0 %v1186
    %1634 = vmatmul.mubr.f32.gmra.mxu0 %v1185
    %v1635 = vpop.f32.mrf.mxu0
    %v1636 = vadd.f32 0.0, %v1635
    %v1637 = vpop.f32.mrf.mxu0
    %1638 = vmatprep.mubr.f32.mxu0 %v1190
    %1639 = vmatmul.mubr.f32.gmra.mxu0 %v1189
    %v1640 = vpop.f32.mrf.mxu0
    %v1641 = vadd.f32 0.0, %v1640
    %v1642 = vpop.f32.mrf.mxu0
    %1643 = vmatprep.mubr.f32.mxu0 %v1194
    %1644 = vmatmul.mubr.f32.gmra.mxu0 %v1193
    %v1645 = vpop.f32.mrf.mxu0
    %v1646 = vadd.f32 0.0, %v1645
    %v1647 = vpop.f32.mrf.mxu0
    %1648 = vmatprep.mubr.f32.mxu0 %v1198
    %1649 = vmatmul.mubr.f32.gmra.mxu0 %v1197
    %v1650 = vpop.f32.mrf.mxu0
    %v1651 = vadd.f32 0.0, %v1650
    %v1652 = vpop.f32.mrf.mxu0
    %1653 = vmatprep.mubr.f32.mxu0 %v1202
    %1654 = vmatmul.mubr.f32.gmra.mxu0 %v1201
    %v1655 = vpop.f32.mrf.mxu0
    %v1656 = vadd.f32 0.0, %v1655
    %v1657 = vpop.f32.mrf.mxu0
    %1658 = vmatprep.mubr.f32.mxu0 %v1206
    %1659 = vmatmul.mubr.f32.gmra.mxu0 %v1205
    %v1660 = vpop.f32.mrf.mxu0
    %v1661 = vadd.f32 0.0, %v1660
    %v1662 = vpop.f32.mrf.mxu0
    %1663 = vmatprep.mubr.f32.mxu0 %v1210
    %1664 = vmatmul.mubr.f32.gmra.mxu0 %v1209
    %v1665 = vpop.f32.mrf.mxu0
    %v1666 = vadd.f32 0.0, %v1665
    %v1667 = vpop.f32.mrf.mxu0
    %1668 = vmatprep.mubr.f32.mxu0 %v1214
    %1669 = vmatmul.mubr.f32.gmra.mxu0 %v1213
    %v1670 = vpop.f32.mrf.mxu0
    %v1671 = vadd.f32 0.0, %v1670
    %v1672 = vpop.f32.mrf.mxu0
    %1673 = vmatprep.mubr.f32.mxu0 %v1218
    %1674 = vmatmul.mubr.f32.gmra.mxu0 %v1217
    %v1675 = vpop.f32.mrf.mxu0
    %v1676 = vadd.f32 0.0, %v1675
    %v1677 = vpop.f32.mrf.mxu0
    %1678 = vmatprep.mubr.f32.mxu0 %v1222
    %1679 = vmatmul.mubr.f32.gmra.mxu0 %v1221
    %v1680 = vpop.f32.mrf.mxu0
    %v1681 = vadd.f32 0.0, %v1680
    %v1682 = vpop.f32.mrf.mxu0
    %1683 = vmatprep.mubr.f32.mxu0 %v1226
    %1684 = vmatmul.mubr.f32.gmra.mxu0 %v1225
    %v1685 = vpop.f32.mrf.mxu0
    %v1686 = vadd.f32 0.0, %v1685
    %v1687 = vpop.f32.mrf.mxu0
    %1688 = vmatprep.mubr.f32.mxu0 %v1230
    %1689 = vmatmul.mubr.f32.gmra.mxu0 %v1229
    %v1690 = vpop.f32.mrf.mxu0
    %v1691 = vadd.f32 0.0, %v1690
    %v1692 = vpop.f32.mrf.mxu0
    %1693 = vmatprep.mubr.f32.mxu0 %v1234
    %1694 = vmatmul.mubr.f32.gmra.mxu0 %v1233
    %v1695 = vpop.f32.mrf.mxu0
    %v1696 = vadd.f32 0.0, %v1695
    %v1697 = vpop.f32.mrf.mxu0
    %1698 = vmatprep.mubr.f32.mxu0 %v1238
    %1699 = vmatmul.mubr.f32.gmra.mxu0 %v1237
    %v1700 = vpop.f32.mrf.mxu0
    %v1701 = vadd.f32 0.0, %v1700
    %v1702 = vpop.f32.mrf.mxu0
    %1703 = vmatprep.mubr.f32.mxu0 %v1242
    %1704 = vmatmul.mubr.f32.gmra.mxu0 %v1241
    %v1705 = vpop.f32.mrf.mxu0
    %v1706 = vadd.f32 0.0, %v1705
    %v1707 = vpop.f32.mrf.mxu0
    %1708 = vmatprep.mubr.f32.mxu0 %v1246
    %1709 = vmatmul.mubr.f32.gmra.mxu0 %v1245
    %v1710 = vpop.f32.mrf.mxu0
    %v1711 = vadd.f32 0.0, %v1710
    %v1712 = vpop.f32.mrf.mxu0
    %1713 = vmatprep.mubr.f32.mxu0 %v1250
    %1714 = vmatmul.mubr.f32.gmra.mxu0 %v1249
    %v1715 = vpop.f32.mrf.mxu0
    %v1716 = vadd.f32 0.0, %v1715
    %v1717 = vpop.f32.mrf.mxu0
    %1718 = vmatprep.mubr.f32.mxu0 %v1254
    %1719 = vmatmul.mubr.f32.gmra.mxu0 %v1253
    %v1720 = vpop.f32.mrf.mxu0
    %v1721 = vadd.f32 0.0, %v1720
    %v1722 = vpop.f32.mrf.mxu0
    %1723 = vmatprep.mubr.f32.mxu0 %v1258
    %1724 = vmatmul.mubr.f32.gmra.mxu0 %v1257
    %v1725 = vpop.f32.mrf.mxu0
    %v1726 = vadd.f32 0.0, %v1725
    %v1727 = vpop.f32.mrf.mxu0
    %1728 = vmatprep.mubr.f32.mxu0 %v1262
    %1729 = vmatmul.mubr.f32.gmra.mxu0 %v1261
    %v1730 = vpop.f32.mrf.mxu0
    %v1731 = vadd.f32 0.0, %v1730
    %v1732 = vpop.f32.mrf.mxu0
    %1733 = vmatprep.mubr.f32.mxu0 %v1266
    %1734 = vmatmul.mubr.f32.gmra.mxu0 %v1265
    %v1735 = vpop.f32.mrf.mxu0
    %v1736 = vadd.f32 0.0, %v1735
    %v1737 = vpop.f32.mrf.mxu0
    %1738 = vmatprep.mubr.f32.mxu0 %v1270
    %1739 = vmatmul.mubr.f32.gmra.mxu0 %v1269
    %v1740 = vpop.f32.mrf.mxu0
    %v1741 = vadd.f32 0.0, %v1740
    %v1742 = vpop.f32.mrf.mxu0
    %1743 = vmatprep.mubr.f32.mxu0 %v1274
    %1744 = vmatmul.mubr.f32.gmra.mxu0 %v1273
    %v1745 = vpop.f32.mrf.mxu0
    %v1746 = vadd.f32 0.0, %v1745
    %v1747 = vpop.f32.mrf.mxu0
    %1748 = vmatprep.mubr.f32.mxu0 %v1278
    %1749 = vmatmul.mubr.f32.gmra.mxu0 %v1277
    %v1750 = vpop.f32.mrf.mxu0
    %v1751 = vadd.f32 0.0, %v1750
    %v1752 = vpop.f32.mrf.mxu0
    %1753 = vmatprep.mubr.f32.mxu0 %v1282
    %1754 = vmatmul.mubr.f32.gmra.mxu0 %v1281
    %v1755 = vpop.f32.mrf.mxu0
    %v1756 = vadd.f32 0.0, %v1755
    %v1757 = vpop.f32.mrf.mxu0
    %1758 = vmatprep.mubr.f32.mxu0 %v1286
    %1759 = vmatmul.mubr.f32.gmra.mxu0 %v1285
    %v1760 = vpop.f32.mrf.mxu0
    %v1761 = vadd.f32 0.0, %v1760
    %v1762 = vpop.f32.mrf.mxu0
    %1763 = vmatprep.mubr.f32.mxu0 %v1290
    %1764 = vmatmul.mubr.f32.gmra.mxu0 %v1289
    %v1765 = vpop.f32.mrf.mxu0
    %v1766 = vadd.f32 0.0, %v1765
    %v1767 = vpop.f32.mrf.mxu0
    %1768 = vmatprep.mubr.f32.mxu0 %v1294
    %1769 = vmatmul.mubr.f32.gmra.mxu0 %v1293
    %v1770 = vpop.f32.mrf.mxu0
    %v1771 = vadd.f32 0.0, %v1770
    %v1772 = vpop.f32.mrf.mxu0
    %1773 = vmatprep.mubr.f32.mxu0 %v1298
    %1774 = vmatmul.mubr.f32.gmra.mxu0 %v1297
    %v1775 = vpop.f32.mrf.mxu0
    %v1776 = vadd.f32 0.0, %v1775
    %v1777 = vpop.f32.mrf.mxu0
    %1778 = vmatprep.mubr.f32.mxu0 %v1302
    %1779 = vmatmul.mubr.f32.gmra.mxu0 %v1301
    %v1780 = vpop.f32.mrf.mxu0
    %v1781 = vadd.f32 0.0, %v1780
    %v1782 = vpop.f32.mrf.mxu0
    %1783 = vmatprep.mubr.f32.mxu0 %v1306
    %1784 = vmatmul.mubr.f32.gmra.mxu0 %v1305
    %v1785 = vpop.f32.mrf.mxu0
    %v1786 = vadd.f32 0.0, %v1785
    %v1787 = vpop.f32.mrf.mxu0
    %1788 = vmatprep.mubr.f32.mxu0 %v1310
    %1789 = vmatmul.mubr.f32.gmra.mxu0 %v1309
    %v1790 = vpop.f32.mrf.mxu0
    %v1791 = vadd.f32 0.0, %v1790
    %v1792 = vpop.f32.mrf.mxu0
    %1793 = vmatprep.mubr.f32.mxu0 %v1314
    %1794 = vmatmul.mubr.f32.gmra.mxu0 %v1313
    %v1795 = vpop.f32.mrf.mxu0
    %v1796 = vadd.f32 0.0, %v1795
    %v1797 = vpop.f32.mrf.mxu0
    %1798 = vmatprep.mubr.f32.mxu0 %v1318
    %1799 = vmatmul.mubr.f32.gmra.mxu0 %v1317
    %v1800 = vpop.f32.mrf.mxu0
    %v1801 = vadd.f32 0.0, %v1800
    %v1802 = vpop.f32.mrf.mxu0
    %1803 = vmatprep.mubr.f32.mxu0 %v1322
    %1804 = vmatmul.mubr.f32.gmra.mxu0 %v1321
    %v1805 = vpop.f32.mrf.mxu0
    %v1806 = vadd.f32 0.0, %v1805
    %v1807 = vpop.f32.mrf.mxu0
    %1808 = vmatprep.mubr.f32.mxu0 %v1326
    %1809 = vmatmul.mubr.f32.gmra.mxu0 %v1325
    %v1810 = vpop.f32.mrf.mxu0
    %v1811 = vadd.f32 0.0, %v1810
    %v1812 = vpop.f32.mrf.mxu0
    %1813 = vmatprep.mubr.f32.mxu0 %v1330
    %1814 = vmatmul.mubr.f32.gmra.mxu0 %v1329
    %v1815 = vpop.f32.mrf.mxu0
    %v1816 = vadd.f32 0.0, %v1815
    %v1817 = vpop.f32.mrf.mxu0
    %1818 = vmatprep.mubr.f32.mxu0 %v1334
    %1819 = vmatmul.mubr.f32.gmra.mxu0 %v1333
    %v1820 = vpop.f32.mrf.mxu0
    %v1821 = vadd.f32 0.0, %v1820
    %v1822 = vpop.f32.mrf.mxu0
    %1823 = vmatprep.mubr.f32.mxu0 %v1338
    %1824 = vmatmul.mubr.f32.gmra.mxu0 %v1337
    %v1825 = vpop.f32.mrf.mxu0
    %v1826 = vadd.f32 0.0, %v1825
    %v1827 = vpop.f32.mrf.mxu0
    %1828 = vmatprep.mubr.f32.mxu0 %v1342
    %1829 = vmatmul.mubr.f32.gmra.mxu0 %v1341
    %v1830 = vpop.f32.mrf.mxu0
    %v1831 = vadd.f32 0.0, %v1830
    %v1832 = vpop.f32.mrf.mxu0
    %1833 = vmatprep.mubr.f32.mxu0 %v1346
    %1834 = vmatmul.mubr.f32.gmra.mxu0 %v1345
    %v1835 = vpop.f32.mrf.mxu0
    %v1836 = vadd.f32 0.0, %v1835
    %v1837 = vpop.f32.mrf.mxu0
    %1838 = vmatprep.mubr.f32.mxu0 %v1350
    %1839 = vmatmul.mubr.f32.gmra.mxu0 %v1349
    %v1840 = vpop.f32.mrf.mxu0
    %v1841 = vadd.f32 0.0, %v1840
    %v1842 = vpop.f32.mrf.mxu0
    %1843 = vmatprep.mubr.f32.mxu0 %v1354
    %1844 = vmatmul.mubr.f32.gmra.mxu0 %v1353
    %v1845 = vpop.f32.mrf.mxu0
    %v1846 = vadd.f32 0.0, %v1845
    %v1847 = vpop.f32.mrf.mxu0
    %1848 = vmatprep.mubr.f32.mxu0 %v1358
    %1849 = vmatmul.mubr.f32.gmra.mxu0 %v1357
    %v1850 = vpop.f32.mrf.mxu0
    %v1851 = vadd.f32 0.0, %v1850
    %v1852 = vpop.f32.mrf.mxu0
    %1853 = vmatprep.mubr.f32.mxu0 %v1362
    %1854 = vmatmul.mubr.f32.gmra.mxu0 %v1361
    %v1855 = vpop.f32.mrf.mxu0
    %v1856 = vadd.f32 0.0, %v1855
    %v1857 = vpop.f32.mrf.mxu0
    %1858 = vmatprep.mubr.f32.mxu0 %v1366
    %1859 = vmatmul.mubr.f32.gmra.mxu0 %v1365
    %v1860 = vpop.f32.mrf.mxu0
    %v1861 = vadd.f32 0.0, %v1860
    %v1862 = vpop.f32.mrf.mxu0
    %1863 = vmatprep.mubr.f32.mxu0 %v1370
    %1864 = vmatmul.mubr.f32.gmra.mxu0 %v1369
    %v1865 = vpop.f32.mrf.mxu0
    %v1866 = vadd.f32 0.0, %v1865
    %v1867 = vpop.f32.mrf.mxu0
    %1868 = vmatprep.mubr.f32.mxu0 %v1374
    %1869 = vmatmul.mubr.f32.gmra.mxu0 %v1373
    %v1870 = vpop.f32.mrf.mxu0
    %v1871 = vadd.f32 0.0, %v1870
    %v1872 = vpop.f32.mrf.mxu0
    %1873 = vmatprep.mubr.f32.mxu0 %v1378
    %1874 = vmatmul.mubr.f32.gmra.mxu0 %v1377
    %v1875 = vpop.f32.mrf.mxu0
    %v1876 = vadd.f32 0.0, %v1875
    %v1877 = vpop.f32.mrf.mxu0
    %1878 = vmatprep.mubr.f32.mxu0 %v1382
    %1879 = vmatmul.mubr.f32.gmra.mxu0 %v1381
    %v1880 = vpop.f32.mrf.mxu0
    %v1881 = vadd.f32 0.0, %v1880
    %v1882 = vpop.f32.mrf.mxu0
    %1883 = vmatprep.mubr.f32.mxu0 %v1386
    %1884 = vmatmul.mubr.f32.gmra.mxu0 %v1385
    %v1885 = vpop.f32.mrf.mxu0
    %v1886 = vadd.f32 0.0, %v1885
    %v1887 = vpop.f32.mrf.mxu0
    %1888 = vmatprep.mubr.f32.mxu0 %v1390
    %1889 = vmatmul.mubr.f32.gmra.mxu0 %v1389
    %v1890 = vpop.f32.mrf.mxu0
    %v1891 = vadd.f32 0.0, %v1890
    %v1892 = vpop.f32.mrf.mxu0
    %1893 = vmatprep.mubr.f32.mxu0 %v1394
    %1894 = vmatmul.mubr.f32.gmra.mxu0 %v1393
    %v1895 = vpop.f32.mrf.mxu0
    %v1896 = vadd.f32 0.0, %v1895
    %v1897 = vpop.f32.mrf.mxu0
    %1898 = vmatprep.mubr.f32.mxu0 %v1398
    %1899 = vmatmul.mubr.f32.gmra.mxu0 %v1397
    %v1900 = vpop.f32.mrf.mxu0
    %v1901 = vadd.f32 0.0, %v1900
    %v1902 = vpop.f32.mrf.mxu0
    %1903 = vmatprep.mubr.f32.mxu0 %v1402
    %1904 = vmatmul.mubr.f32.gmra.mxu0 %v1401
    %v1905 = vpop.f32.mrf.mxu0
    %v1906 = vadd.f32 0.0, %v1905
    %v1907 = vpop.f32.mrf.mxu0
    %1908 = vmatprep.mubr.f32.mxu0 %v1406
    %1909 = vmatmul.mubr.f32.gmra.mxu0 %v1405
    %v1910 = vpop.f32.mrf.mxu0
    %v1911 = vadd.f32 0.0, %v1910
    %v1912 = vpop.f32.mrf.mxu0
    %1913 = vmatprep.mubr.f32.mxu0 %v1410
    %1914 = vmatmul.mubr.f32.gmra.mxu0 %v1409
    %v1915 = vpop.f32.mrf.mxu0
    %v1916 = vadd.f32 0.0, %v1915
    %v1917 = vpop.f32.mrf.mxu0
    %1918 = vmatprep.mubr.f32.mxu0 %v1414
    %1919 = vmatmul.mubr.f32.gmra.mxu0 %v1413
    %v1920 = vpop.f32.mrf.mxu0
    %v1921 = vadd.f32 0.0, %v1920
    %v1922 = vpop.f32.mrf.mxu0
    %1923 = vmatprep.mubr.f32.mxu0 %v1418
    %1924 = vmatmul.mubr.f32.gmra.mxu0 %v1417
    %v1925 = vpop.f32.mrf.mxu0
    %v1926 = vadd.f32 0.0, %v1925
    %v1927 = vpop.f32.mrf.mxu0
    %1928 = vmatprep.mubr.f32.mxu0 %v1422
    %1929 = vmatmul.mubr.f32.gmra.mxu0 %v1421
    %v1930 = vpop.f32.mrf.mxu0
    %v1931 = vadd.f32 0.0, %v1930
    %v1932 = vpop.f32.mrf.mxu0
    %1933 = vmatprep.mubr.f32.mxu0 %v1426
    %1934 = vmatmul.mubr.f32.gmra.mxu0 %v1425
    %v1935 = vpop.f32.mrf.mxu0
    %v1936 = vadd.f32 0.0, %v1935
    %v1937 = vpop.f32.mrf.mxu0
    %1938 = vmatprep.mubr.f32.mxu0 %v1430
    %1939 = vmatmul.mubr.f32.gmra.mxu0 %v1429
    %v1940 = vpop.f32.mrf.mxu0
    %v1941 = vadd.f32 0.0, %v1940
    %v1942 = vpop.f32.mrf.mxu0
    %1943 = vmatprep.mubr.f32.mxu0 %v1434
    %1944 = vmatmul.mubr.f32.gmra.mxu0 %v1433
    %v1945 = vpop.f32.mrf.mxu0
    %v1946 = vadd.f32 0.0, %v1945
    %v1947 = vpop.f32.mrf.mxu0
    %1948 = vmatprep.mubr.f32.mxu0 %v1438
    %1949 = vmatmul.mubr.f32.gmra.mxu0 %v1437
    %v1950 = vpop.f32.mrf.mxu0
    %v1951 = vadd.f32 0.0, %v1950
    %v1952 = vpop.f32.mrf.mxu0
    %1953 = vdwg.mxu0
    %1954 = vmatprep.subr.mxu0 0.0
    %1955 = vmatpush1.msra.mxu0 %v1552
    %1956 = vmatprep.subr.mxu0 0.0
    %1957 = vmatpush1.msra.mxu0 %v1551
    %1958 = vmatprep.subr.mxu0 0.0
    %1959 = vmatpush1.msra.mxu0 %v1550
    %1960 = vmatprep.subr.mxu0 0.0
    %1961 = vmatpush1.msra.mxu0 %v1549
    %1962 = vmatprep.subr.mxu0 0.0
    %1963 = vmatpush1.msra.mxu0 %v1548
    %1964 = vmatprep.subr.mxu0 0.0
    %1965 = vmatpush1.msra.mxu0 %v1547
    %1966 = vmatprep.subr.mxu0 0.0
    %1967 = vmatpush1.msra.mxu0 %v1546
    %1968 = vmatprep.subr.mxu0 0.0
    %1969 = vmatpush1.msra.mxu0 %v1545
    %1970 = vmatprep.subr.mxu0 0.0
    %1971 = vmatpush1.msra.mxu0 %v1544
    %1972 = vmatprep.subr.mxu0 0.0
    %1973 = vmatpush1.msra.mxu0 %v1543
    %1974 = vmatprep.subr.mxu0 0.0
    %1975 = vmatpush1.msra.mxu0 %v1542
    %1976 = vmatprep.subr.mxu0 0.0
    %1977 = vmatpush1.msra.mxu0 %v1541
    %1978 = vmatprep.subr.mxu0 0.0
    %1979 = vmatpush1.msra.mxu0 %v1540
    %1980 = vmatprep.subr.mxu0 0.0
    %1981 = vmatpush1.msra.mxu0 %v1539
    %1982 = vmatprep.subr.mxu0 0.0
    %1983 = vmatpush1.msra.mxu0 %v1538
    %1984 = vmatprep.subr.mxu0 0.0
    %1985 = vmatpush1.msra.mxu0 %v1537
    %1986 = vmatprep.subr.mxu0 0.0
    %1987 = vmatpush2.msra.mxu0 %v1568
    %1988 = vmatprep.subr.mxu0 0.0
    %1989 = vmatpush2.msra.mxu0 %v1567
    %1990 = vmatprep.subr.mxu0 0.0
    %1991 = vmatpush2.msra.mxu0 %v1566
    %1992 = vmatprep.subr.mxu0 0.0
    %1993 = vmatpush2.msra.mxu0 %v1565
    %1994 = vmatprep.subr.mxu0 0.0
    %1995 = vmatpush2.msra.mxu0 %v1564
    %1996 = vmatprep.subr.mxu0 0.0
    %1997 = vmatpush2.msra.mxu0 %v1563
    %1998 = vmatprep.subr.mxu0 0.0
    %1999 = vmatpush2.msra.mxu0 %v1562
    %2000 = vmatprep.subr.mxu0 0.0
    %2001 = vmatpush2.msra.mxu0 %v1561
    %2002 = vmatprep.subr.mxu0 0.0
    %2003 = vmatpush2.msra.mxu0 %v1560
    %2004 = vmatprep.subr.mxu0 0.0
    %2005 = vmatpush2.msra.mxu0 %v1559
    %2006 = vmatprep.subr.mxu0 0.0
    %2007 = vmatpush2.msra.mxu0 %v1558
    %2008 = vmatprep.subr.mxu0 0.0
    %2009 = vmatpush2.msra.mxu0 %v1557
    %2010 = vmatprep.subr.mxu0 0.0
    %2011 = vmatpush2.msra.mxu0 %v1556
    %2012 = vmatprep.subr.mxu0 0.0
    %2013 = vmatpush2.msra.mxu0 %v1555
    %2014 = vmatprep.subr.mxu0 0.0
    %2015 = vmatpush2.msra.mxu0 %v1554
    %2016 = vmatprep.subr.mxu0 0.0
    %2017 = vmatpush2.msra.mxu0 %v1553
    %2018 = vmatprep.mubr.f32.mxu0 %v1188
    %2019 = vmatmul.mubr.f32.gmra.mxu0 %v1187
    %v2020 = vpop.f32.mrf.mxu0
    %v2021 = vadd.f32 %v1636, %v2020
    %v2022 = vpop.f32.mrf.mxu0
    %2023 = vmatprep.mubr.f32.mxu0 %v1192
    %2024 = vmatmul.mubr.f32.gmra.mxu0 %v1191
    %v2025 = vpop.f32.mrf.mxu0
    %v2026 = vadd.f32 %v1641, %v2025
    %v2027 = vpop.f32.mrf.mxu0
    %2028 = vmatprep.mubr.f32.mxu0 %v1196
    %2029 = vmatmul.mubr.f32.gmra.mxu0 %v1195
    %v2030 = vpop.f32.mrf.mxu0
    %v2031 = vadd.f32 %v1646, %v2030
    %v2032 = vpop.f32.mrf.mxu0
    %2033 = vmatprep.mubr.f32.mxu0 %v1200
    %2034 = vmatmul.mubr.f32.gmra.mxu0 %v1199
    %v2035 = vpop.f32.mrf.mxu0
    %v2036 = vadd.f32 %v1651, %v2035
    %v2037 = vpop.f32.mrf.mxu0
    %2038 = vmatprep.mubr.f32.mxu0 %v1204
    %2039 = vmatmul.mubr.f32.gmra.mxu0 %v1203
    %v2040 = vpop.f32.mrf.mxu0
    %v2041 = vadd.f32 %v1656, %v2040
    %v2042 = vpop.f32.mrf.mxu0
    %2043 = vmatprep.mubr.f32.mxu0 %v1208
    %2044 = vmatmul.mubr.f32.gmra.mxu0 %v1207
    %v2045 = vpop.f32.mrf.mxu0
    %v2046 = vadd.f32 %v1661, %v2045
    %v2047 = vpop.f32.mrf.mxu0
    %2048 = vmatprep.mubr.f32.mxu0 %v1212
    %2049 = vmatmul.mubr.f32.gmra.mxu0 %v1211
    %v2050 = vpop.f32.mrf.mxu0
    %v2051 = vadd.f32 %v1666, %v2050
    %v2052 = vpop.f32.mrf.mxu0
    %2053 = vmatprep.mubr.f32.mxu0 %v1216
    %2054 = vmatmul.mubr.f32.gmra.mxu0 %v1215
    %v2055 = vpop.f32.mrf.mxu0
    %v2056 = vadd.f32 %v1671, %v2055
    %v2057 = vpop.f32.mrf.mxu0
    %2058 = vmatprep.mubr.f32.mxu0 %v1220
    %2059 = vmatmul.mubr.f32.gmra.mxu0 %v1219
    %v2060 = vpop.f32.mrf.mxu0
    %v2061 = vadd.f32 %v1676, %v2060
    %v2062 = vpop.f32.mrf.mxu0
    %2063 = vmatprep.mubr.f32.mxu0 %v1224
    %2064 = vmatmul.mubr.f32.gmra.mxu0 %v1223
    %v2065 = vpop.f32.mrf.mxu0
    %v2066 = vadd.f32 %v1681, %v2065
    %v2067 = vpop.f32.mrf.mxu0
    %2068 = vmatprep.mubr.f32.mxu0 %v1228
    %2069 = vmatmul.mubr.f32.gmra.mxu0 %v1227
    %v2070 = vpop.f32.mrf.mxu0
    %v2071 = vadd.f32 %v1686, %v2070
    %v2072 = vpop.f32.mrf.mxu0
    %2073 = vmatprep.mubr.f32.mxu0 %v1232
    %2074 = vmatmul.mubr.f32.gmra.mxu0 %v1231
    %v2075 = vpop.f32.mrf.mxu0
    %v2076 = vadd.f32 %v1691, %v2075
    %v2077 = vpop.f32.mrf.mxu0
    %2078 = vmatprep.mubr.f32.mxu0 %v1236
    %2079 = vmatmul.mubr.f32.gmra.mxu0 %v1235
    %v2080 = vpop.f32.mrf.mxu0
    %v2081 = vadd.f32 %v1696, %v2080
    %v2082 = vpop.f32.mrf.mxu0
    %2083 = vmatprep.mubr.f32.mxu0 %v1240
    %2084 = vmatmul.mubr.f32.gmra.mxu0 %v1239
    %v2085 = vpop.f32.mrf.mxu0
    %v2086 = vadd.f32 %v1701, %v2085
    %v2087 = vpop.f32.mrf.mxu0
    %2088 = vmatprep.mubr.f32.mxu0 %v1244
    %2089 = vmatmul.mubr.f32.gmra.mxu0 %v1243
    %v2090 = vpop.f32.mrf.mxu0
    %v2091 = vadd.f32 %v1706, %v2090
    %v2092 = vpop.f32.mrf.mxu0
    %2093 = vmatprep.mubr.f32.mxu0 %v1248
    %2094 = vmatmul.mubr.f32.gmra.mxu0 %v1247
    %v2095 = vpop.f32.mrf.mxu0
    %v2096 = vadd.f32 %v1711, %v2095
    %v2097 = vpop.f32.mrf.mxu0
    %2098 = vmatprep.mubr.f32.mxu0 %v1252
    %2099 = vmatmul.mubr.f32.gmra.mxu0 %v1251
    %v2100 = vpop.f32.mrf.mxu0
    %v2101 = vadd.f32 %v1716, %v2100
    %v2102 = vpop.f32.mrf.mxu0
    %2103 = vmatprep.mubr.f32.mxu0 %v1256
    %2104 = vmatmul.mubr.f32.gmra.mxu0 %v1255
    %v2105 = vpop.f32.mrf.mxu0
    %v2106 = vadd.f32 %v1721, %v2105
    %v2107 = vpop.f32.mrf.mxu0
    %2108 = vmatprep.mubr.f32.mxu0 %v1260
    %2109 = vmatmul.mubr.f32.gmra.mxu0 %v1259
    %v2110 = vpop.f32.mrf.mxu0
    %v2111 = vadd.f32 %v1726, %v2110
    %v2112 = vpop.f32.mrf.mxu0
    %2113 = vmatprep.mubr.f32.mxu0 %v1264
    %2114 = vmatmul.mubr.f32.gmra.mxu0 %v1263
    %v2115 = vpop.f32.mrf.mxu0
    %v2116 = vadd.f32 %v1731, %v2115
    %v2117 = vpop.f32.mrf.mxu0
    %2118 = vmatprep.mubr.f32.mxu0 %v1268
    %2119 = vmatmul.mubr.f32.gmra.mxu0 %v1267
    %v2120 = vpop.f32.mrf.mxu0
    %v2121 = vadd.f32 %v1736, %v2120
    %v2122 = vpop.f32.mrf.mxu0
    %2123 = vmatprep.mubr.f32.mxu0 %v1272
    %2124 = vmatmul.mubr.f32.gmra.mxu0 %v1271
    %v2125 = vpop.f32.mrf.mxu0
    %v2126 = vadd.f32 %v1741, %v2125
    %v2127 = vpop.f32.mrf.mxu0
    %2128 = vmatprep.mubr.f32.mxu0 %v1276
    %2129 = vmatmul.mubr.f32.gmra.mxu0 %v1275
    %v2130 = vpop.f32.mrf.mxu0
    %v2131 = vadd.f32 %v1746, %v2130
    %v2132 = vpop.f32.mrf.mxu0
    %2133 = vmatprep.mubr.f32.mxu0 %v1280
    %2134 = vmatmul.mubr.f32.gmra.mxu0 %v1279
    %v2135 = vpop.f32.mrf.mxu0
    %v2136 = vadd.f32 %v1751, %v2135
    %v2137 = vpop.f32.mrf.mxu0
    %2138 = vmatprep.mubr.f32.mxu0 %v1284
    %2139 = vmatmul.mubr.f32.gmra.mxu0 %v1283
    %v2140 = vpop.f32.mrf.mxu0
    %v2141 = vadd.f32 %v1756, %v2140
    %v2142 = vpop.f32.mrf.mxu0
    %2143 = vmatprep.mubr.f32.mxu0 %v1288
    %2144 = vmatmul.mubr.f32.gmra.mxu0 %v1287
    %v2145 = vpop.f32.mrf.mxu0
    %v2146 = vadd.f32 %v1761, %v2145
    %v2147 = vpop.f32.mrf.mxu0
    %2148 = vmatprep.mubr.f32.mxu0 %v1292
    %2149 = vmatmul.mubr.f32.gmra.mxu0 %v1291
    %v2150 = vpop.f32.mrf.mxu0
    %v2151 = vadd.f32 %v1766, %v2150
    %v2152 = vpop.f32.mrf.mxu0
    %2153 = vmatprep.mubr.f32.mxu0 %v1296
    %2154 = vmatmul.mubr.f32.gmra.mxu0 %v1295
    %v2155 = vpop.f32.mrf.mxu0
    %v2156 = vadd.f32 %v1771, %v2155
    %v2157 = vpop.f32.mrf.mxu0
    %2158 = vmatprep.mubr.f32.mxu0 %v1300
    %2159 = vmatmul.mubr.f32.gmra.mxu0 %v1299
    %v2160 = vpop.f32.mrf.mxu0
    %v2161 = vadd.f32 %v1776, %v2160
    %v2162 = vpop.f32.mrf.mxu0
    %2163 = vmatprep.mubr.f32.mxu0 %v1304
    %2164 = vmatmul.mubr.f32.gmra.mxu0 %v1303
    %v2165 = vpop.f32.mrf.mxu0
    %v2166 = vadd.f32 %v1781, %v2165
    %v2167 = vpop.f32.mrf.mxu0
    %2168 = vmatprep.mubr.f32.mxu0 %v1308
    %2169 = vmatmul.mubr.f32.gmra.mxu0 %v1307
    %v2170 = vpop.f32.mrf.mxu0
    %v2171 = vadd.f32 %v1786, %v2170
    %v2172 = vpop.f32.mrf.mxu0
    %2173 = vmatprep.mubr.f32.mxu0 %v1312
    %2174 = vmatmul.mubr.f32.gmra.mxu0 %v1311
    %v2175 = vpop.f32.mrf.mxu0
    %v2176 = vadd.f32 %v1791, %v2175
    %v2177 = vpop.f32.mrf.mxu0
    %2178 = vmatprep.mubr.f32.mxu0 %v1316
    %2179 = vmatmul.mubr.f32.gmra.mxu0 %v1315
    %v2180 = vpop.f32.mrf.mxu0
    %v2181 = vadd.f32 %v1796, %v2180
    %v2182 = vpop.f32.mrf.mxu0
    %2183 = vmatprep.mubr.f32.mxu0 %v1320
    %2184 = vmatmul.mubr.f32.gmra.mxu0 %v1319
    %v2185 = vpop.f32.mrf.mxu0
    %v2186 = vadd.f32 %v1801, %v2185
    %v2187 = vpop.f32.mrf.mxu0
    %2188 = vmatprep.mubr.f32.mxu0 %v1324
    %2189 = vmatmul.mubr.f32.gmra.mxu0 %v1323
    %v2190 = vpop.f32.mrf.mxu0
    %v2191 = vadd.f32 %v1806, %v2190
    %v2192 = vpop.f32.mrf.mxu0
    %2193 = vmatprep.mubr.f32.mxu0 %v1328
    %2194 = vmatmul.mubr.f32.gmra.mxu0 %v1327
    %v2195 = vpop.f32.mrf.mxu0
    %v2196 = vadd.f32 %v1811, %v2195
    %v2197 = vpop.f32.mrf.mxu0
    %2198 = vmatprep.mubr.f32.mxu0 %v1332
    %2199 = vmatmul.mubr.f32.gmra.mxu0 %v1331
    %v2200 = vpop.f32.mrf.mxu0
    %v2201 = vadd.f32 %v1816, %v2200
    %v2202 = vpop.f32.mrf.mxu0
    %2203 = vmatprep.mubr.f32.mxu0 %v1336
    %2204 = vmatmul.mubr.f32.gmra.mxu0 %v1335
    %v2205 = vpop.f32.mrf.mxu0
    %v2206 = vadd.f32 %v1821, %v2205
    %v2207 = vpop.f32.mrf.mxu0
    %2208 = vmatprep.mubr.f32.mxu0 %v1340
    %2209 = vmatmul.mubr.f32.gmra.mxu0 %v1339
    %v2210 = vpop.f32.mrf.mxu0
    %v2211 = vadd.f32 %v1826, %v2210
    %v2212 = vpop.f32.mrf.mxu0
    %2213 = vmatprep.mubr.f32.mxu0 %v1344
    %2214 = vmatmul.mubr.f32.gmra.mxu0 %v1343
    %v2215 = vpop.f32.mrf.mxu0
    %v2216 = vadd.f32 %v1831, %v2215
    %v2217 = vpop.f32.mrf.mxu0
    %2218 = vmatprep.mubr.f32.mxu0 %v1348
    %2219 = vmatmul.mubr.f32.gmra.mxu0 %v1347
    %v2220 = vpop.f32.mrf.mxu0
    %v2221 = vadd.f32 %v1836, %v2220
    %v2222 = vpop.f32.mrf.mxu0
    %2223 = vmatprep.mubr.f32.mxu0 %v1352
    %2224 = vmatmul.mubr.f32.gmra.mxu0 %v1351
    %v2225 = vpop.f32.mrf.mxu0
    %v2226 = vadd.f32 %v1841, %v2225
    %v2227 = vpop.f32.mrf.mxu0
    %2228 = vmatprep.mubr.f32.mxu0 %v1356
    %2229 = vmatmul.mubr.f32.gmra.mxu0 %v1355
    %v2230 = vpop.f32.mrf.mxu0
    %v2231 = vadd.f32 %v1846, %v2230
    %v2232 = vpop.f32.mrf.mxu0
    %2233 = vmatprep.mubr.f32.mxu0 %v1360
    %2234 = vmatmul.mubr.f32.gmra.mxu0 %v1359
    %v2235 = vpop.f32.mrf.mxu0
    %v2236 = vadd.f32 %v1851, %v2235
    %v2237 = vpop.f32.mrf.mxu0
    %2238 = vmatprep.mubr.f32.mxu0 %v1364
    %2239 = vmatmul.mubr.f32.gmra.mxu0 %v1363
    %v2240 = vpop.f32.mrf.mxu0
    %v2241 = vadd.f32 %v1856, %v2240
    %v2242 = vpop.f32.mrf.mxu0
    %2243 = vmatprep.mubr.f32.mxu0 %v1368
    %2244 = vmatmul.mubr.f32.gmra.mxu0 %v1367
    %v2245 = vpop.f32.mrf.mxu0
    %v2246 = vadd.f32 %v1861, %v2245
    %v2247 = vpop.f32.mrf.mxu0
    %2248 = vmatprep.mubr.f32.mxu0 %v1372
    %2249 = vmatmul.mubr.f32.gmra.mxu0 %v1371
    %v2250 = vpop.f32.mrf.mxu0
    %v2251 = vadd.f32 %v1866, %v2250
    %v2252 = vpop.f32.mrf.mxu0
    %2253 = vmatprep.mubr.f32.mxu0 %v1376
    %2254 = vmatmul.mubr.f32.gmra.mxu0 %v1375
    %v2255 = vpop.f32.mrf.mxu0
    %v2256 = vadd.f32 %v1871, %v2255
    %v2257 = vpop.f32.mrf.mxu0
    %2258 = vmatprep.mubr.f32.mxu0 %v1380
    %2259 = vmatmul.mubr.f32.gmra.mxu0 %v1379
    %v2260 = vpop.f32.mrf.mxu0
    %v2261 = vadd.f32 %v1876, %v2260
    %v2262 = vpop.f32.mrf.mxu0
    %2263 = vmatprep.mubr.f32.mxu0 %v1384
    %2264 = vmatmul.mubr.f32.gmra.mxu0 %v1383
    %v2265 = vpop.f32.mrf.mxu0
    %v2266 = vadd.f32 %v1881, %v2265
    %v2267 = vpop.f32.mrf.mxu0
    %2268 = vmatprep.mubr.f32.mxu0 %v1388
    %2269 = vmatmul.mubr.f32.gmra.mxu0 %v1387
    %v2270 = vpop.f32.mrf.mxu0
    %v2271 = vadd.f32 %v1886, %v2270
    %v2272 = vpop.f32.mrf.mxu0
    %2273 = vmatprep.mubr.f32.mxu0 %v1392
    %2274 = vmatmul.mubr.f32.gmra.mxu0 %v1391
    %v2275 = vpop.f32.mrf.mxu0
    %v2276 = vadd.f32 %v1891, %v2275
    %v2277 = vpop.f32.mrf.mxu0
    %2278 = vmatprep.mubr.f32.mxu0 %v1396
    %2279 = vmatmul.mubr.f32.gmra.mxu0 %v1395
    %v2280 = vpop.f32.mrf.mxu0
    %v2281 = vadd.f32 %v1896, %v2280
    %v2282 = vpop.f32.mrf.mxu0
    %2283 = vmatprep.mubr.f32.mxu0 %v1400
    %2284 = vmatmul.mubr.f32.gmra.mxu0 %v1399
    %v2285 = vpop.f32.mrf.mxu0
    %v2286 = vadd.f32 %v1901, %v2285
    %v2287 = vpop.f32.mrf.mxu0
    %2288 = vmatprep.mubr.f32.mxu0 %v1404
    %2289 = vmatmul.mubr.f32.gmra.mxu0 %v1403
    %v2290 = vpop.f32.mrf.mxu0
    %v2291 = vadd.f32 %v1906, %v2290
    %v2292 = vpop.f32.mrf.mxu0
    %2293 = vmatprep.mubr.f32.mxu0 %v1408
    %2294 = vmatmul.mubr.f32.gmra.mxu0 %v1407
    %v2295 = vpop.f32.mrf.mxu0
    %v2296 = vadd.f32 %v1911, %v2295
    %v2297 = vpop.f32.mrf.mxu0
    %2298 = vmatprep.mubr.f32.mxu0 %v1412
    %2299 = vmatmul.mubr.f32.gmra.mxu0 %v1411
    %v2300 = vpop.f32.mrf.mxu0
    %v2301 = vadd.f32 %v1916, %v2300
    %v2302 = vpop.f32.mrf.mxu0
    %2303 = vmatprep.mubr.f32.mxu0 %v1416
    %2304 = vmatmul.mubr.f32.gmra.mxu0 %v1415
    %v2305 = vpop.f32.mrf.mxu0
    %v2306 = vadd.f32 %v1921, %v2305
    %v2307 = vpop.f32.mrf.mxu0
    %2308 = vmatprep.mubr.f32.mxu0 %v1420
    %2309 = vmatmul.mubr.f32.gmra.mxu0 %v1419
    %v2310 = vpop.f32.mrf.mxu0
    %v2311 = vadd.f32 %v1926, %v2310
    %v2312 = vpop.f32.mrf.mxu0
    %2313 = vmatprep.mubr.f32.mxu0 %v1424
    %2314 = vmatmul.mubr.f32.gmra.mxu0 %v1423
    %v2315 = vpop.f32.mrf.mxu0
    %v2316 = vadd.f32 %v1931, %v2315
    %v2317 = vpop.f32.mrf.mxu0
    %2318 = vmatprep.mubr.f32.mxu0 %v1428
    %2319 = vmatmul.mubr.f32.gmra.mxu0 %v1427
    %v2320 = vpop.f32.mrf.mxu0
    %v2321 = vadd.f32 %v1936, %v2320
    %v2322 = vpop.f32.mrf.mxu0
    %2323 = vmatprep.mubr.f32.mxu0 %v1432
    %2324 = vmatmul.mubr.f32.gmra.mxu0 %v1431
    %v2325 = vpop.f32.mrf.mxu0
    %v2326 = vadd.f32 %v1941, %v2325
    %v2327 = vpop.f32.mrf.mxu0
    %2328 = vmatprep.mubr.f32.mxu0 %v1436
    %2329 = vmatmul.mubr.f32.gmra.mxu0 %v1435
    %v2330 = vpop.f32.mrf.mxu0
    %v2331 = vadd.f32 %v1946, %v2330
    %v2332 = vpop.f32.mrf.mxu0
    %2333 = vmatprep.mubr.f32.mxu0 %v1440
    %2334 = vmatmul.mubr.f32.gmra.mxu0 %v1439
    %v2335 = vpop.f32.mrf.mxu0
    %v2336 = vadd.f32 %v1951, %v2335
    %v2337 = vpop.f32.mrf.mxu0
    %2338 = vdwg.mxu0
    %v2339 = vadd.f32 %v1441, %v2021
    %v2340 = vadd.f32 %v1442, %v2026
    %v2341 = vadd.f32 %v1443, %v2031
    %v2342 = vadd.f32 %v1444, %v2036
    %v2343 = vadd.f32 %v1445, %v2041
    %v2344 = vadd.f32 %v1446, %v2046
    %v2345 = vadd.f32 %v1447, %v2051
    %v2346 = vadd.f32 %v1448, %v2056
    %v2347 = vadd.f32 %v1449, %v2061
    %v2348 = vadd.f32 %v1450, %v2066
    %v2349 = vadd.f32 %v1451, %v2071
    %v2350 = vadd.f32 %v1452, %v2076
    %v2351 = vadd.f32 %v1453, %v2081
    %v2352 = vadd.f32 %v1454, %v2086
    %v2353 = vadd.f32 %v1455, %v2091
    %v2354 = vadd.f32 %v1456, %v2096
    %v2355 = vadd.f32 %v1457, %v2101
    %v2356 = vadd.f32 %v1458, %v2106
    %v2357 = vadd.f32 %v1459, %v2111
    %v2358 = vadd.f32 %v1460, %v2116
    %v2359 = vadd.f32 %v1461, %v2121
    %v2360 = vadd.f32 %v1462, %v2126
    %v2361 = vadd.f32 %v1463, %v2131
    %v2362 = vadd.f32 %v1464, %v2136
    %v2363 = vadd.f32 %v1465, %v2141
    %v2364 = vadd.f32 %v1466, %v2146
    %v2365 = vadd.f32 %v1467, %v2151
    %v2366 = vadd.f32 %v1468, %v2156
    %v2367 = vadd.f32 %v1469, %v2161
    %v2368 = vadd.f32 %v1470, %v2166
    %v2369 = vadd.f32 %v1471, %v2171
    %v2370 = vadd.f32 %v1472, %v2176
    %v2371 = vadd.f32 %v1473, %v2181
    %v2372 = vadd.f32 %v1474, %v2186
    %v2373 = vadd.f32 %v1475, %v2191
    %v2374 = vadd.f32 %v1476, %v2196
    %v2375 = vadd.f32 %v1477, %v2201
    %v2376 = vadd.f32 %v1478, %v2206
    %v2377 = vadd.f32 %v1479, %v2211
    %v2378 = vadd.f32 %v1480, %v2216
    %v2379 = vadd.f32 %v1481, %v2221
    %v2380 = vadd.f32 %v1482, %v2226
    %v2381 = vadd.f32 %v1483, %v2231
    %v2382 = vadd.f32 %v1484, %v2236
    %v2383 = vadd.f32 %v1485, %v2241
    %v2384 = vadd.f32 %v1486, %v2246
    %v2385 = vadd.f32 %v1487, %v2251
    %v2386 = vadd.f32 %v1488, %v2256
    %v2387 = vadd.f32 %v1489, %v2261
    %v2388 = vadd.f32 %v1490, %v2266
    %v2389 = vadd.f32 %v1491, %v2271
    %v2390 = vadd.f32 %v1492, %v2276
    %v2391 = vadd.f32 %v1493, %v2281
    %v2392 = vadd.f32 %v1494, %v2286
    %v2393 = vadd.f32 %v1495, %v2291
    %v2394 = vadd.f32 %v1496, %v2296
    %v2395 = vadd.f32 %v1497, %v2301
    %v2396 = vadd.f32 %v1498, %v2306
    %v2397 = vadd.f32 %v1499, %v2311
    %v2398 = vadd.f32 %v1500, %v2316
    %v2399 = vadd.f32 %v1501, %v2321
    %v2400 = vadd.f32 %v1502, %v2326
    %v2401 = vadd.f32 %v1503, %v2331
    %v2402 = vadd.f32 %v1504, %v2336
    %2403 = vst [vmem:[#allocation8] sm:$0xff] %v2339
    %2404 = vst [vmem:[#allocation8 + $0x8] sm:$0xff] %v2340
    %2405 = vst [vmem:[#allocation8 + $0x10] sm:$0xff] %v2341
    %2406 = vst [vmem:[#allocation8 + $0x18] sm:$0xff] %v2342
    %2407 = vst [vmem:[#allocation8 + $0x20] sm:$0xff] %v2343
    %2408 = vst [vmem:[#allocation8 + $0x28] sm:$0xff] %v2344
    %2409 = vst [vmem:[#allocation8 + $0x30] sm:$0xff] %v2345
    %2410 = vst [vmem:[#allocation8 + $0x38] sm:$0xff] %v2346
    %2411 = vst [vmem:[#allocation8 + $0x40] sm:$0xff] %v2347
    %2412 = vst [vmem:[#allocation8 + $0x48] sm:$0xff] %v2348
    %2413 = vst [vmem:[#allocation8 + $0x50] sm:$0xff] %v2349
    %2414 = vst [vmem:[#allocation8 + $0x58] sm:$0xff] %v2350
    %2415 = vst [vmem:[#allocation8 + $0x60] sm:$0xff] %v2351
    %2416 = vst [vmem:[#allocation8 + $0x68] sm:$0xff] %v2352
    %2417 = vst [vmem:[#allocation8 + $0x70] sm:$0xff] %v2353
    %2418 = vst [vmem:[#allocation8 + $0x78] sm:$0xff] %v2354
    %2419 = vst [vmem:[#allocation8 + $0x80] sm:$0xff] %v2355
    %2420 = vst [vmem:[#allocation8 + $0x88] sm:$0xff] %v2356
    %2421 = vst [vmem:[#allocation8 + $0x90] sm:$0xff] %v2357
    %2422 = vst [vmem:[#allocation8 + $0x98] sm:$0xff] %v2358
    %2423 = vst [vmem:[#allocation8 + $0xa0] sm:$0xff] %v2359
    %2424 = vst [vmem:[#allocation8 + $0xa8] sm:$0xff] %v2360
    %2425 = vst [vmem:[#allocation8 + $0xb0] sm:$0xff] %v2361
    %2426 = vst [vmem:[#allocation8 + $0xb8] sm:$0xff] %v2362
    %2427 = vst [vmem:[#allocation8 + $0xc0] sm:$0xff] %v2363
    %2428 = vst [vmem:[#allocation8 + $0xc8] sm:$0xff] %v2364
    %2429 = vst [vmem:[#allocation8 + $0xd0] sm:$0xff] %v2365
    %2430 = vst [vmem:[#allocation8 + $0xd8] sm:$0xff] %v2366
    %2431 = vst [vmem:[#allocation8 + $0xe0] sm:$0xff] %v2367
    %2432 = vst [vmem:[#allocation8 + $0xe8] sm:$0xff] %v2368
    %2433 = vst [vmem:[#allocation8 + $0xf0] sm:$0xff] %v2369
    %2434 = vst [vmem:[#allocation8 + $0xf8] sm:$0xff] %v2370
    %2435 = vst [vmem:[#allocation8 + $0x100] sm:$0xff] %v2371
    %2436 = vst [vmem:[#allocation8 + $0x108] sm:$0xff] %v2372
    %2437 = vst [vmem:[#allocation8 + $0x110] sm:$0xff] %v2373
    %2438 = vst [vmem:[#allocation8 + $0x118] sm:$0xff] %v2374
    %2439 = vst [vmem:[#allocation8 + $0x120] sm:$0xff] %v2375
    %2440 = vst [vmem:[#allocation8 + $0x128] sm:$0xff] %v2376
    %2441 = vst [vmem:[#allocation8 + $0x130] sm:$0xff] %v2377
    %2442 = vst [vmem:[#allocation8 + $0x138] sm:$0xff] %v2378
    %2443 = vst [vmem:[#allocation8 + $0x140] sm:$0xff] %v2379
    %2444 = vst [vmem:[#allocation8 + $0x148] sm:$0xff] %v2380
    %2445 = vst [vmem:[#allocation8 + $0x150] sm:$0xff] %v2381
    %2446 = vst [vmem:[#allocation8 + $0x158] sm:$0xff] %v2382
    %2447 = vst [vmem:[#allocation8 + $0x160] sm:$0xff] %v2383
    %2448 = vst [vmem:[#allocation8 + $0x168] sm:$0xff] %v2384
    %2449 = vst [vmem:[#allocation8 + $0x170] sm:$0xff] %v2385
    %2450 = vst [vmem:[#allocation8 + $0x178] sm:$0xff] %v2386
    %2451 = vst [vmem:[#allocation8 + $0x180] sm:$0xff] %v2387
    %2452 = vst [vmem:[#allocation8 + $0x188] sm:$0xff] %v2388
    %2453 = vst [vmem:[#allocation8 + $0x190] sm:$0xff] %v2389
    %2454 = vst [vmem:[#allocation8 + $0x198] sm:$0xff] %v2390
    %2455 = vst [vmem:[#allocation8 + $0x1a0] sm:$0xff] %v2391
    %2456 = vst [vmem:[#allocation8 + $0x1a8] sm:$0xff] %v2392
    %2457 = vst [vmem:[#allocation8 + $0x1b0] sm:$0xff] %v2393
    %2458 = vst [vmem:[#allocation8 + $0x1b8] sm:$0xff] %v2394
    %2459 = vst [vmem:[#allocation8 + $0x1c0] sm:$0xff] %v2395
    %2460 = vst [vmem:[#allocation8 + $0x1c8] sm:$0xff] %v2396
    %2461 = vst [vmem:[#allocation8 + $0x1d0] sm:$0xff] %v2397
    %2462 = vst [vmem:[#allocation8 + $0x1d8] sm:$0xff] %v2398
    %2463 = vst [vmem:[#allocation8 + $0x1e0] sm:$0xff] %v2399
    %2464 = vst [vmem:[#allocation8 + $0x1e8] sm:$0xff] %v2400
    %2465 = vst [vmem:[#allocation8 + $0x1f0] sm:$0xff] %v2401
    %2466 = vst [vmem:[#allocation8 + $0x1f8] sm:$0xff] %v2402
    // Predicated region
    $region38: #{linear_relu_ffn.1} parent=1 // pred_check
      _
    $region39: #{linear_relu_ffn.1} parent=1 // pred_check_branch
      %2468 = sbr.rel (0) target = $region41
    $region40: #{linear_relu_ffn.1} parent=1 // pred_region
      %s2470 = ssub.s32 8192, 8192
      %2471 = vsyncadd [#allocation4], %s2470
      %s2472 = sshll.u32 [#allocation8], 4
      %s2473 = int_to_ptr.vmem [resolvable:$true] %s2472
      %2478 = dma.vmem_to_hbm [thread:$0]  %s2473, 8192, %s5, [#allocation4], 128, 128, 8
    $region41: #{linear_relu_ffn.1} parent=1 // pred_fallthru
      _
    // Predicated region
    $region42: #{linear_relu_ffn.1} parent=1 // pred_check
      _
    $region43: #{linear_relu_ffn.1} parent=1 // pred_check_branch
      %2480 = sbr.rel (0) target = $region45
    $region44: #{linear_relu_ffn.1} parent=1 // pred_region
      %2481 = dma.done [#allocation4], 8192
    $region45: #{linear_relu_ffn.1} parent=1 // pred_fallthru
      _
    %2482 = vsyncpa [#allocation3], 1
    %2483 = vsyncpa [#allocation6], 1
    %2484 = vsyncpa [#allocation4], 1

</llo_original>
